<compile_context>
chip_gen: v7x
topology: tpu7x:2x2x1
jax: 0.10.0
libtpu: 0.0.40
codegen_flags: <defaults>
</compile_context>

<pallas_src>
import functools

import numpy as np
import jax
import jax.numpy as jnp
from jax.experimental import pallas as pl
from jax.experimental.pallas import tpu as pltpu

# ----------------------- synthetic "module" parameters -----------------------
FILTER_LENGTH = 16      # small, but same structure as the default 800
HOP_LENGTH = 4          # filter_length / hop_length == 4, same as 800/200
WIN_LENGTH = 16
CUTOFF = FILTER_LENGTH // 2 + 1


def _round_up(x, m):
    return ((x + m - 1) // m) * m


def _hann_periodic(m):
    # scipy.signal.get_window('hann', m, fftbins=True)
    n = np.arange(m)
    return 0.5 - 0.5 * np.cos(2.0 * np.pi * n / m)


def _pad_center(w, size):
    lpad = (size - len(w)) // 2
    return np.pad(w, (lpad, size - len(w) - lpad))


def make_stft_bases(filter_length, hop_length, win_length):
    """Deterministic re-implementation of STFT.__init__ buffers (no librosa)."""
    scale = filter_length / hop_length
    fourier_basis = np.fft.fft(np.eye(filter_length))
    cutoff = filter_length // 2 + 1
    fourier_basis = np.vstack([np.real(fourier_basis[:cutoff, :]),
                               np.imag(fourier_basis[:cutoff, :])])
    forward_basis = fourier_basis[:, None, :].astype(np.float32)             # (2C, 1, F)
    inverse_basis = np.linalg.pinv(scale * fourier_basis).T[:, None, :].astype(np.float32)
    fft_window = _pad_center(_hann_periodic(win_length), filter_length).astype(np.float32)
    forward_basis = forward_basis * fft_window
    inverse_basis = inverse_basis * fft_window
    return forward_basis, inverse_basis


def window_sumsquare_np(n_frames, hop_length, win_length, n_fft):
    """librosa-free window_sumsquare (window='hann', norm=None, float32)."""
    n = n_fft + hop_length * (n_frames - 1)
    x = np.zeros(n, dtype=np.float32)
    win_sq = (_hann_periodic(win_length).astype(np.float32)) ** 2
    win_sq = _pad_center(win_sq, n_fft)
    for i in range(n_frames):
        sample = i * hop_length
        x[sample:min(n, sample + n_fft)] += win_sq[:max(0, min(n_fft, n - sample))]
    return x


# ------------------------------- Pallas kernel --------------------------------
def _stft_ola_kernel(sig_ref, comb_ref, out_ref, *, tt, n_frames, need_mask):
    """Fused STFT -> iSTFT -> overlap-add for one tile of `tt` frames.

    sig_ref  : (Lh_pad, hop)      hop-blocked padded signal of this batch
                                  (constant index_map -> VMEM resident per batch)
    comb_ref : (R, R, hop, HP)    combined (forward @ inverse) basis, blocked by
                                  (input-tap block r, output-shift block s);
                                  constant index_map -> DMA'd once
    out_ref  : (TTo, HP)          hop-blocked, overlap-added output rows
                                  [i*tt, i*tt + tt + R - 1) of this batch
    """
    r_blocks = comb_ref.shape[0]
    tto, hp = out_ref.shape

    base = pl.multiple_of(pl.program_id(1) * tt, 8)

    # The tt frames of this tile read tt + R - 1 consecutive hop-rows; the r-th
    # tap block of every frame is a shifted (tt, hop) slice of the signal.
    rows = [sig_ref[pl.ds(base + r, tt), :] for r in range(r_blocks)]

    if need_mask:
        # The last tile may cover frames >= n_frames (grid padding) whose taps
        # alias real samples -> zero their contribution.  Mask applied to the
        # f32 partials (no bf16 VPU work -> v5e-safe).
        frame_id = jax.lax.broadcasted_iota(jnp.int32, (tt, 1), 0) + base
        mask = (frame_id < n_frames).astype(jnp.float32)

    # TODO(synk): magnitude/phase (torch.atan2) are never materialized — Mosaic
    # has no atan2 lowering and forward() only returns the reconstruction; since
    # mag*cos(atan2(i,r)) == r and mag*sin(atan2(i,r)) == i exactly, the inverse
    # basis is folded into the forward basis on the host and this loop IS the
    # full STFT + iSTFT + overlap-add.
    for s in range(r_blocks):
        part = jnp.dot(rows[0], comb_ref[0, s], preferred_element_type=jnp.float32)
        for r in range(1, r_blocks):
            part = part + jnp.dot(rows[r], comb_ref[r, s],
                                  preferred_element_type=jnp.float32)
        if need_mask:
            part = part * mask
        if s == 0:
            out_ref[pl.ds(0, tt), :] = part                 # first write, no zero-fill
            if tto > tt:                                    # seam / pad rows start at 0
                out_ref[pl.ds(tt, tto - tt), :] = jnp.zeros((tto - tt, hp), jnp.float32)
        else:
            out_ref[pl.ds(s, tt), :] += part                # shifted overlap-add


# --------------------------------- wrapper ------------------------------------
def stft_forward(x, forward_basis, inverse_basis,
                 filter_length=FILTER_LENGTH, hop_length=HOP_LENGTH,
                 win_length=WIN_LENGTH, tile_rows=512,
                 compute_dtype=jnp.float32):
    """Equivalent of STFT.forward: transform -> (mag, phase) -> inverse."""
    B, num_samples = x.shape
    F = filter_length
    hop = hop_length
    half = F // 2
    cutoff = F // 2 + 1
    assert F % hop == 0, "filter_length must be a multiple of hop_length"
    assert tile_rows % 8 == 0 and tile_rows >= 8, "tile_rows must be a multiple of 8"
    R = F // hop

    # ---- transform() glue: reflect pad (matches F.pad mode='reflect') ----
    padded = jnp.pad(x, ((0, 0), (half, half)), mode="reflect")       # (B, L)
    L = padded.shape[1]
    T = (L - F) // hop + 1

    # ---- tiling / padded sizes (lane-dense, VMEM-bounded) ----
    # (production guidance: keep tile_rows >= 256; tiny tiles only for tests)
    TT = min(tile_rows, _round_up(T, 8))
    if B * pl.cdiv(T, TT) < 2 and TT > 8:
        # v7x has 2 TensorCores: make sure the "parallel" grid has >= 2 steps.
        TT = max(8, _round_up(pl.cdiv(T, 2), 8))
    n_t = pl.cdiv(T, TT)
    T_pad = n_t * TT
    TTo = _round_up(TT + R - 1, 8)                # per-tile OLA rows (sublane-aligned)
    HP = _round_up(hop, 128)                      # lane-dense output columns
    # review fix: never smaller than the hop-rows actually holding samples
    Lh_pad = _round_up(max(T_pad + R - 1, -(-L // hop)), 8)

    # hop-blocked signal: plain reshape + zero tail pad — no gather, no 4x copy.
    # bf16 cast (if any) is host-side only (v5e has no bf16 VPU).
    sig = jnp.zeros((B, Lh_pad * hop), compute_dtype).at[:, :L].set(
        padded.astype(compute_dtype))
    sig_blocks = sig.reshape(B, Lh_pad, hop)                           # (B, Lh_pad, hop)

    # host-side weight prep: fold inverse basis (and the F/hop scale) into the
    # forward basis, then block by (input-tap r, output-shift s), lane-padded.
    fwd = forward_basis[:, 0, :].astype(np.float64)                    # (2C, F)
    inv = inverse_basis[:, 0, :].astype(np.float64)                    # (2C, F)
    comb = (fwd.T @ inv) * (float(F) / hop)                            # (F, F)
    comb_blk = np.zeros((R, R, hop, HP), np.float32)
    for r in range(R):
        for s in range(R):
            comb_blk[r, s, :, :hop] = comb[r * hop:(r + 1) * hop,
                                           s * hop:(s + 1) * hop]
    comb_blk = jnp.asarray(comb_blk, dtype=compute_dtype)

    kernel = functools.partial(_stft_ola_kernel, tt=TT, n_frames=T,
                               need_mask=(T_pad > T))

    itemsize = jnp.dtype(compute_dtype).itemsize
    cost = pl.CostEstimate(
        flops=2 * B * n_t * R * R * TT * hop * HP,
        transcendentals=0,
        bytes_accessed=int(B * Lh_pad * hop * itemsize
                           + R * R * hop * HP * itemsize
                           + B * n_t * TTo * HP * 4))

    # NOTE(v7x): the per-batch-resident signal (Lh_pad*hop*itemsize, x2 buffers)
    # plus weights and 2x output tiles must stay under the 32 MiB scoped budget
    # (64 MiB physical per TC); for very long audio shrink tile residency or
    # tile the signal along T.
    out_pad = pl.pallas_call(
        kernel,
        out_shape=jax.ShapeDtypeStruct((B, n_t * TTo, HP), jnp.float32),
        grid=(B, n_t),
        in_specs=[
            # per-batch signal, resident across all T tiles of that batch
            pl.BlockSpec((None, Lh_pad, hop), lambda b, i: (b, 0, 0)),
            # combined basis: constant index_map -> DMA'd once, VMEM resident
            pl.BlockSpec((R, R, hop, HP), lambda b, i: (0, 0, 0, 0)),
        ],
        out_specs=pl.BlockSpec((None, TTo, HP), lambda b, i: (b, i, 0)),
        compiler_params=pltpu.CompilerParams(
            dimension_semantics=("parallel", "parallel"),
            vmem_limit_bytes=32 * 1024 * 1024,
        ),
        cost_estimate=cost,
    )(sig_blocks, comb_blk)

    # ---- seam glue: fold each tile's R-1 trailing OLA rows into the next tile ----
    slab = out_pad.reshape(B, n_t, TTo, HP)[:, :, :TT + R - 1, :hop]
    body = slab[:, :, :TT, :].reshape(B, T_pad, hop)                   # disjoint rows
    res = jnp.zeros((B, T_pad + TT, hop), jnp.float32).at[:, :T_pad, :].set(body)
    if R > 1:
        tail = slab[:, :, TT:, :]                                      # (B, n_t, R-1, hop)
        tails = jnp.zeros((B, n_t, TT, hop), jnp.float32).at[:, :, :R - 1, :].set(tail)
        res = res.at[:, TT:TT + T_pad, :].add(tails.reshape(B, T_pad, hop))
    inv_t = res[:, :T + R - 1, :].reshape(B, (T + R - 1) * hop)        # (B, out_len)

    # window-sum correction (only where window_sum > tiny, as in the module);
    # NaN-safe denominator.  The filter_length/hop scale is already folded into
    # the combined basis (exact).
    wss = jnp.asarray(window_sumsquare_np(T, hop, win_length, F))
    tiny = np.finfo(np.float32).tiny
    inv_t = jnp.where(wss[None, :] > tiny,
                      inv_t / jnp.maximum(wss[None, :], tiny), inv_t)

    # trim filter_length//2 from both ends
    inv_t = inv_t[:, half:inv_t.shape[1] - half]
    return inv_t[:, None, :]                                            # (B, 1, num_samples)


if __name__ == "__main__":
    forward_basis, inverse_basis = make_stft_bases(FILTER_LENGTH, HOP_LENGTH, WIN_LENGTH)

    key = jax.random.PRNGKey(0)
    x = jax.random.normal(key, (2, 64), dtype=jnp.float32)   # (batch, num_samples)

    # tile_rows=8 -> grid (B=2, n_t=3): exercises the multi-tile seam fold and
    # the padded-frame masking path (T=17 is not a multiple of 8).
    y = stft_forward(x, forward_basis, inverse_basis, tile_rows=8)
    y = jax.block_until_ready(y)
    assert y.shape == (2, 1, 64), y.shape
    assert bool(jnp.all(jnp.isfinite(y)))
    # STFT -> iSTFT with window-sum correction should reconstruct the input.
    recon_err = float(jnp.max(jnp.abs(y[:, 0, :] - x)))
    assert recon_err < 1e-2, recon_err

    # bf16 MXU fast path (v6e/v7x guidance): host-side cast, f32 accumulation,
    # single-tile grid (n_t=1) — looser reconstruction tolerance.
    y16 = stft_forward(x, forward_basis, inverse_basis, compute_dtype=jnp.bfloat16)
    y16 = jax.block_until_ready(y16)
    assert y16.shape == (2, 1, 64), y16.shape
    assert bool(jnp.all(jnp.isfinite(y16)))
    recon_err16 = float(jnp.max(jnp.abs(y16[:, 0, :] - x)))
    assert recon_err16 < 1e-1, recon_err16

    print("KERNEL_OK")
</pallas_src>

<mosaic_0001>
module attributes {stable_mosaic.version = 11 : i64} {
  func.func @_stft_ola_kernel(%arg0: i32, %arg1: i32, %arg2: memref<1x32x4xf32, #tpu.memory_space<vmem>>, %arg3: memref<4x4x4x128xf32, #tpu.memory_space<vmem>>, %arg4: memref<1x16x128xf32, #tpu.memory_space<vmem>>) attributes {dimension_semantics = [#tpu.dimension_semantics<parallel>, #tpu.dimension_semantics<parallel>], iteration_bounds = array<i64: 2, 3>, scalar_prefetch = 0 : i64, scratch_operands = 0 : i64, tpu.core_type = #tpu.core_type<tc>, window_params = [{transform_indices = @transform_0, window_bounds = array<i64: 1, 32, 4>}, {pipeline_mode = #tpu.pipeline_mode<synchronous>, transform_indices = @transform_1, window_bounds = array<i64: 4, 4, 4, 128>}, {transform_indices = @transform_2, window_bounds = array<i64: 1, 16, 128>}]} {
    %c8_i32 = arith.constant 8 : i32
    %0 = arith.muli %arg1, %c8_i32 : i32
    %1 = tpu.assume_multiple %0, 8 : i32
    %c0_i32 = arith.constant 0 : i32
    %2 = arith.addi %1, %c0_i32 : i32
    %c0 = arith.constant 0 : index
    %3 = arith.index_cast %2 : i32 to index
    %c0_0 = arith.constant 0 : index
    %4 = vector.load %arg2[%c0, %3, %c0_0] : memref<1x32x4xf32, #tpu.memory_space<vmem>>, vector<1x8x4xf32>
    %5 = vector.shape_cast %4 : vector<1x8x4xf32> to vector<8x4xf32>
    %c1_i32 = arith.constant 1 : i32
    %6 = arith.addi %1, %c1_i32 : i32
    %c0_1 = arith.constant 0 : index
    %7 = arith.index_cast %6 : i32 to index
    %c0_2 = arith.constant 0 : index
    %8 = vector.load %arg2[%c0_1, %7, %c0_2] : memref<1x32x4xf32, #tpu.memory_space<vmem>>, vector<1x8x4xf32>
    %9 = vector.shape_cast %8 : vector<1x8x4xf32> to vector<8x4xf32>
    %c2_i32 = arith.constant 2 : i32
    %10 = arith.addi %1, %c2_i32 : i32
    %c0_3 = arith.constant 0 : index
    %11 = arith.index_cast %10 : i32 to index
    %c0_4 = arith.constant 0 : index
    %12 = vector.load %arg2[%c0_3, %11, %c0_4] : memref<1x32x4xf32, #tpu.memory_space<vmem>>, vector<1x8x4xf32>
    %13 = vector.shape_cast %12 : vector<1x8x4xf32> to vector<8x4xf32>
    %c3_i32 = arith.constant 3 : i32
    %14 = arith.addi %1, %c3_i32 : i32
    %c0_5 = arith.constant 0 : index
    %15 = arith.index_cast %14 : i32 to index
    %c0_6 = arith.constant 0 : index
    %16 = vector.load %arg2[%c0_5, %15, %c0_6] : memref<1x32x4xf32, #tpu.memory_space<vmem>>, vector<1x8x4xf32>
    %17 = vector.shape_cast %16 : vector<1x8x4xf32> to vector<8x4xf32>
    %18 = tpu.iota {dimensions = array<i32: 0>} : vector<8x1xi32>
    %19 = vector.broadcast %1 : i32 to vector<8x1xi32>
    %20 = arith.addi %18, %19 : vector<8x1xi32>
    %c17_i32 = arith.constant 17 : i32
    %21 = vector.broadcast %c17_i32 : i32 to vector<8x1xi32>
    %22 = arith.cmpi slt, %20, %21 : vector<8x1xi32>
    %23 = arith.extui %22 : vector<8x1xi1> to vector<8x1xi32>
    %24 = arith.sitofp %23 : vector<8x1xi32> to vector<8x1xf32>
    %c0_7 = arith.constant 0 : index
    %c0_8 = arith.constant 0 : index
    %c0_9 = arith.constant 0 : index
    %c0_10 = arith.constant 0 : index
    %25 = vector.load %arg3[%c0_7, %c0_8, %c0_9, %c0_10] : memref<4x4x4x128xf32, #tpu.memory_space<vmem>>, vector<1x1x4x128xf32>
    %26 = vector.shape_cast %25 : vector<1x1x4x128xf32> to vector<4x128xf32>
    %cst = arith.constant dense<0.000000e+00> : vector<8x128xf32>
    %27 = tpu.matmul %5, %26, %cst {dimension_numbers = #tpu.dot_dimension_numbers<[1], [0], [0], [1], [0, 0, 1, 1], [], []>} : vector<8x4xf32>, vector<4x128xf32>, vector<8x128xf32> -> vector<8x128xf32>
    %c1 = arith.constant 1 : index
    %c0_11 = arith.constant 0 : index
    %c0_12 = arith.constant 0 : index
    %c0_13 = arith.constant 0 : index
    %28 = vector.load %arg3[%c1, %c0_11, %c0_12, %c0_13] : memref<4x4x4x128xf32, #tpu.memory_space<vmem>>, vector<1x1x4x128xf32>
    %29 = vector.shape_cast %28 : vector<1x1x4x128xf32> to vector<4x128xf32>
    %cst_14 = arith.constant dense<0.000000e+00> : vector<8x128xf32>
    %30 = tpu.matmul %9, %29, %cst_14 {dimension_numbers = #tpu.dot_dimension_numbers<[1], [0], [0], [1], [0, 0, 1, 1], [], []>} : vector<8x4xf32>, vector<4x128xf32>, vector<8x128xf32> -> vector<8x128xf32>
    %31 = arith.addf %27, %30 : vector<8x128xf32>
    %c2 = arith.constant 2 : index
    %c0_15 = arith.constant 0 : index
    %c0_16 = arith.constant 0 : index
    %c0_17 = arith.constant 0 : index
    %32 = vector.load %arg3[%c2, %c0_15, %c0_16, %c0_17] : memref<4x4x4x128xf32, #tpu.memory_space<vmem>>, vector<1x1x4x128xf32>
    %33 = vector.shape_cast %32 : vector<1x1x4x128xf32> to vector<4x128xf32>
    %cst_18 = arith.constant dense<0.000000e+00> : vector<8x128xf32>
    %34 = tpu.matmul %13, %33, %cst_18 {dimension_numbers = #tpu.dot_dimension_numbers<[1], [0], [0], [1], [0, 0, 1, 1], [], []>} : vector<8x4xf32>, vector<4x128xf32>, vector<8x128xf32> -> vector<8x128xf32>
    %35 = arith.addf %31, %34 : vector<8x128xf32>
    %c3 = arith.constant 3 : index
    %c0_19 = arith.constant 0 : index
    %c0_20 = arith.constant 0 : index
    %c0_21 = arith.constant 0 : index
    %36 = vector.load %arg3[%c3, %c0_19, %c0_20, %c0_21] : memref<4x4x4x128xf32, #tpu.memory_space<vmem>>, vector<1x1x4x128xf32>
    %37 = vector.shape_cast %36 : vector<1x1x4x128xf32> to vector<4x128xf32>
    %cst_22 = arith.constant dense<0.000000e+00> : vector<8x128xf32>
    %38 = tpu.matmul %17, %37, %cst_22 {dimension_numbers = #tpu.dot_dimension_numbers<[1], [0], [0], [1], [0, 0, 1, 1], [], []>} : vector<8x4xf32>, vector<4x128xf32>, vector<8x128xf32> -> vector<8x128xf32>
    %39 = arith.addf %35, %38 : vector<8x128xf32>
    %40 = vector.broadcast %24 : vector<8x1xf32> to vector<8x128xf32>
    %41 = arith.mulf %39, %40 : vector<8x128xf32>
    %c0_23 = arith.constant 0 : index
    %c0_24 = arith.constant 0 : index
    %c0_25 = arith.constant 0 : index
    %42 = vector.load %arg4[%c0_23, %c0_24, %c0_25] : memref<1x16x128xf32, #tpu.memory_space<vmem>>, vector<1x8x128xf32>
    %43 = vector.shape_cast %42 : vector<1x8x128xf32> to vector<8x128xf32>
    %44 = vector.shape_cast %41 : vector<8x128xf32> to vector<1x8x128xf32>
    tpu.vector_store %arg4[%c0_23, %c0_24, %c0_25], %44 {strides = array<i32>} : memref<1x16x128xf32, #tpu.memory_space<vmem>>, vector<1x8x128xf32>,
    %cst_26 = arith.constant 0.000000e+00 : f32
    %45 = vector.broadcast %cst_26 : f32 to vector<8x128xf32>
    %c0_27 = arith.constant 0 : index
    %c8 = arith.constant 8 : index
    %c0_28 = arith.constant 0 : index
    %46 = vector.load %arg4[%c0_27, %c8, %c0_28] : memref<1x16x128xf32, #tpu.memory_space<vmem>>, vector<1x8x128xf32>
    %47 = vector.shape_cast %46 : vector<1x8x128xf32> to vector<8x128xf32>
    %48 = vector.shape_cast %45 : vector<8x128xf32> to vector<1x8x128xf32>
    tpu.vector_store %arg4[%c0_27, %c8, %c0_28], %48 {strides = array<i32>} : memref<1x16x128xf32, #tpu.memory_space<vmem>>, vector<1x8x128xf32>,
    %c0_29 = arith.constant 0 : index
    %c1_30 = arith.constant 1 : index
    %c0_31 = arith.constant 0 : index
    %c0_32 = arith.constant 0 : index
    %49 = vector.load %arg3[%c0_29, %c1_30, %c0_31, %c0_32] : memref<4x4x4x128xf32, #tpu.memory_space<vmem>>, vector<1x1x4x128xf32>
    %50 = vector.shape_cast %49 : vector<1x1x4x128xf32> to vector<4x128xf32>
    %cst_33 = arith.constant dense<0.000000e+00> : vector<8x128xf32>
    %51 = tpu.matmul %5, %50, %cst_33 {dimension_numbers = #tpu.dot_dimension_numbers<[1], [0], [0], [1], [0, 0, 1, 1], [], []>} : vector<8x4xf32>, vector<4x128xf32>, vector<8x128xf32> -> vector<8x128xf32>
    %c1_34 = arith.constant 1 : index
    %c1_35 = arith.constant 1 : index
    %c0_36 = arith.constant 0 : index
    %c0_37 = arith.constant 0 : index
    %52 = vector.load %arg3[%c1_34, %c1_35, %c0_36, %c0_37] : memref<4x4x4x128xf32, #tpu.memory_space<vmem>>, vector<1x1x4x128xf32>
    %53 = vector.shape_cast %52 : vector<1x1x4x128xf32> to vector<4x128xf32>
    %cst_38 = arith.constant dense<0.000000e+00> : vector<8x128xf32>
    %54 = tpu.matmul %9, %53, %cst_38 {dimension_numbers = #tpu.dot_dimension_numbers<[1], [0], [0], [1], [0, 0, 1, 1], [], []>} : vector<8x4xf32>, vector<4x128xf32>, vector<8x128xf32> -> vector<8x128xf32>
    %55 = arith.addf %51, %54 : vector<8x128xf32>
    %c2_39 = arith.constant 2 : index
    %c1_40 = arith.constant 1 : index
    %c0_41 = arith.constant 0 : index
    %c0_42 = arith.constant 0 : index
    %56 = vector.load %arg3[%c2_39, %c1_40, %c0_41, %c0_42] : memref<4x4x4x128xf32, #tpu.memory_space<vmem>>, vector<1x1x4x128xf32>
    %57 = vector.shape_cast %56 : vector<1x1x4x128xf32> to vector<4x128xf32>
    %cst_43 = arith.constant dense<0.000000e+00> : vector<8x128xf32>
    %58 = tpu.matmul %13, %57, %cst_43 {dimension_numbers = #tpu.dot_dimension_numbers<[1], [0], [0], [1], [0, 0, 1, 1], [], []>} : vector<8x4xf32>, vector<4x128xf32>, vector<8x128xf32> -> vector<8x128xf32>
    %59 = arith.addf %55, %58 : vector<8x128xf32>
    %c3_44 = arith.constant 3 : index
    %c1_45 = arith.constant 1 : index
    %c0_46 = arith.constant 0 : index
    %c0_47 = arith.constant 0 : index
    %60 = vector.load %arg3[%c3_44, %c1_45, %c0_46, %c0_47] : memref<4x4x4x128xf32, #tpu.memory_space<vmem>>, vector<1x1x4x128xf32>
    %61 = vector.shape_cast %60 : vector<1x1x4x128xf32> to vector<4x128xf32>
    %cst_48 = arith.constant dense<0.000000e+00> : vector<8x128xf32>
    %62 = tpu.matmul %17, %61, %cst_48 {dimension_numbers = #tpu.dot_dimension_numbers<[1], [0], [0], [1], [0, 0, 1, 1], [], []>} : vector<8x4xf32>, vector<4x128xf32>, vector<8x128xf32> -> vector<8x128xf32>
    %63 = arith.addf %59, %62 : vector<8x128xf32>
    %64 = vector.broadcast %24 : vector<8x1xf32> to vector<8x128xf32>
    %65 = arith.mulf %63, %64 : vector<8x128xf32>
    %c0_49 = arith.constant 0 : index
    %c1_50 = arith.constant 1 : index
    %c0_51 = arith.constant 0 : index
    %66 = vector.load %arg4[%c0_49, %c1_50, %c0_51] : memref<1x16x128xf32, #tpu.memory_space<vmem>>, vector<1x8x128xf32>
    %67 = vector.shape_cast %66 : vector<1x8x128xf32> to vector<8x128xf32>
    %68 = arith.addf %67, %65 : vector<8x128xf32>
    %c0_52 = arith.constant 0 : index
    %c1_53 = arith.constant 1 : index
    %c0_54 = arith.constant 0 : index
    %69 = vector.load %arg4[%c0_52, %c1_53, %c0_54] : memref<1x16x128xf32, #tpu.memory_space<vmem>>, vector<1x8x128xf32>
    %70 = vector.shape_cast %69 : vector<1x8x128xf32> to vector<8x128xf32>
    %71 = vector.shape_cast %68 : vector<8x128xf32> to vector<1x8x128xf32>
    tpu.vector_store %arg4[%c0_52, %c1_53, %c0_54], %71 {strides = array<i32>} : memref<1x16x128xf32, #tpu.memory_space<vmem>>, vector<1x8x128xf32>,
    %c0_55 = arith.constant 0 : index
    %c2_56 = arith.constant 2 : index
    %c0_57 = arith.constant 0 : index
    %c0_58 = arith.constant 0 : index
    %72 = vector.load %arg3[%c0_55, %c2_56, %c0_57, %c0_58] : memref<4x4x4x128xf32, #tpu.memory_space<vmem>>, vector<1x1x4x128xf32>
    %73 = vector.shape_cast %72 : vector<1x1x4x128xf32> to vector<4x128xf32>
    %cst_59 = arith.constant dense<0.000000e+00> : vector<8x128xf32>
    %74 = tpu.matmul %5, %73, %cst_59 {dimension_numbers = #tpu.dot_dimension_numbers<[1], [0], [0], [1], [0, 0, 1, 1], [], []>} : vector<8x4xf32>, vector<4x128xf32>, vector<8x128xf32> -> vector<8x128xf32>
    %c1_60 = arith.constant 1 : index
    %c2_61 = arith.constant 2 : index
    %c0_62 = arith.constant 0 : index
    %c0_63 = arith.constant 0 : index
    %75 = vector.load %arg3[%c1_60, %c2_61, %c0_62, %c0_63] : memref<4x4x4x128xf32, #tpu.memory_space<vmem>>, vector<1x1x4x128xf32>
    %76 = vector.shape_cast %75 : vector<1x1x4x128xf32> to vector<4x128xf32>
    %cst_64 = arith.constant dense<0.000000e+00> : vector<8x128xf32>
    %77 = tpu.matmul %9, %76, %cst_64 {dimension_numbers = #tpu.dot_dimension_numbers<[1], [0], [0], [1], [0, 0, 1, 1], [], []>} : vector<8x4xf32>, vector<4x128xf32>, vector<8x128xf32> -> vector<8x128xf32>
    %78 = arith.addf %74, %77 : vector<8x128xf32>
    %c2_65 = arith.constant 2 : index
    %c2_66 = arith.constant 2 : index
    %c0_67 = arith.constant 0 : index
    %c0_68 = arith.constant 0 : index
    %79 = vector.load %arg3[%c2_65, %c2_66, %c0_67, %c0_68] : memref<4x4x4x128xf32, #tpu.memory_space<vmem>>, vector<1x1x4x128xf32>
    %80 = vector.shape_cast %79 : vector<1x1x4x128xf32> to vector<4x128xf32>
    %cst_69 = arith.constant dense<0.000000e+00> : vector<8x128xf32>
    %81 = tpu.matmul %13, %80, %cst_69 {dimension_numbers = #tpu.dot_dimension_numbers<[1], [0], [0], [1], [0, 0, 1, 1], [], []>} : vector<8x4xf32>, vector<4x128xf32>, vector<8x128xf32> -> vector<8x128xf32>
    %82 = arith.addf %78, %81 : vector<8x128xf32>
    %c3_70 = arith.constant 3 : index
    %c2_71 = arith.constant 2 : index
    %c0_72 = arith.constant 0 : index
    %c0_73 = arith.constant 0 : index
    %83 = vector.load %arg3[%c3_70, %c2_71, %c0_72, %c0_73] : memref<4x4x4x128xf32, #tpu.memory_space<vmem>>, vector<1x1x4x128xf32>
    %84 = vector.shape_cast %83 : vector<1x1x4x128xf32> to vector<4x128xf32>
    %cst_74 = arith.constant dense<0.000000e+00> : vector<8x128xf32>
    %85 = tpu.matmul %17, %84, %cst_74 {dimension_numbers = #tpu.dot_dimension_numbers<[1], [0], [0], [1], [0, 0, 1, 1], [], []>} : vector<8x4xf32>, vector<4x128xf32>, vector<8x128xf32> -> vector<8x128xf32>
    %86 = arith.addf %82, %85 : vector<8x128xf32>
    %87 = vector.broadcast %24 : vector<8x1xf32> to vector<8x128xf32>
    %88 = arith.mulf %86, %87 : vector<8x128xf32>
    %c0_75 = arith.constant 0 : index
    %c2_76 = arith.constant 2 : index
    %c0_77 = arith.constant 0 : index
    %89 = vector.load %arg4[%c0_75, %c2_76, %c0_77] : memref<1x16x128xf32, #tpu.memory_space<vmem>>, vector<1x8x128xf32>
    %90 = vector.shape_cast %89 : vector<1x8x128xf32> to vector<8x128xf32>
    %91 = arith.addf %90, %88 : vector<8x128xf32>
    %c0_78 = arith.constant 0 : index
    %c2_79 = arith.constant 2 : index
    %c0_80 = arith.constant 0 : index
    %92 = vector.load %arg4[%c0_78, %c2_79, %c0_80] : memref<1x16x128xf32, #tpu.memory_space<vmem>>, vector<1x8x128xf32>
    %93 = vector.shape_cast %92 : vector<1x8x128xf32> to vector<8x128xf32>
    %94 = vector.shape_cast %91 : vector<8x128xf32> to vector<1x8x128xf32>
    tpu.vector_store %arg4[%c0_78, %c2_79, %c0_80], %94 {strides = array<i32>} : memref<1x16x128xf32, #tpu.memory_space<vmem>>, vector<1x8x128xf32>,
    %c0_81 = arith.constant 0 : index
    %c3_82 = arith.constant 3 : index
    %c0_83 = arith.constant 0 : index
    %c0_84 = arith.constant 0 : index
    %95 = vector.load %arg3[%c0_81, %c3_82, %c0_83, %c0_84] : memref<4x4x4x128xf32, #tpu.memory_space<vmem>>, vector<1x1x4x128xf32>
    %96 = vector.shape_cast %95 : vector<1x1x4x128xf32> to vector<4x128xf32>
    %cst_85 = arith.constant dense<0.000000e+00> : vector<8x128xf32>
    %97 = tpu.matmul %5, %96, %cst_85 {dimension_numbers = #tpu.dot_dimension_numbers<[1], [0], [0], [1], [0, 0, 1, 1], [], []>} : vector<8x4xf32>, vector<4x128xf32>, vector<8x128xf32> -> vector<8x128xf32>
    %c1_86 = arith.constant 1 : index
    %c3_87 = arith.constant 3 : index
    %c0_88 = arith.constant 0 : index
    %c0_89 = arith.constant 0 : index
    %98 = vector.load %arg3[%c1_86, %c3_87, %c0_88, %c0_89] : memref<4x4x4x128xf32, #tpu.memory_space<vmem>>, vector<1x1x4x128xf32>
    %99 = vector.shape_cast %98 : vector<1x1x4x128xf32> to vector<4x128xf32>
    %cst_90 = arith.constant dense<0.000000e+00> : vector<8x128xf32>
    %100 = tpu.matmul %9, %99, %cst_90 {dimension_numbers = #tpu.dot_dimension_numbers<[1], [0], [0], [1], [0, 0, 1, 1], [], []>} : vector<8x4xf32>, vector<4x128xf32>, vector<8x128xf32> -> vector<8x128xf32>
    %101 = arith.addf %97, %100 : vector<8x128xf32>
    %c2_91 = arith.constant 2 : index
    %c3_92 = arith.constant 3 : index
    %c0_93 = arith.constant 0 : index
    %c0_94 = arith.constant 0 : index
    %102 = vector.load %arg3[%c2_91, %c3_92, %c0_93, %c0_94] : memref<4x4x4x128xf32, #tpu.memory_space<vmem>>, vector<1x1x4x128xf32>
    %103 = vector.shape_cast %102 : vector<1x1x4x128xf32> to vector<4x128xf32>
    %cst_95 = arith.constant dense<0.000000e+00> : vector<8x128xf32>
    %104 = tpu.matmul %13, %103, %cst_95 {dimension_numbers = #tpu.dot_dimension_numbers<[1], [0], [0], [1], [0, 0, 1, 1], [], []>} : vector<8x4xf32>, vector<4x128xf32>, vector<8x128xf32> -> vector<8x128xf32>
    %105 = arith.addf %101, %104 : vector<8x128xf32>
    %c3_96 = arith.constant 3 : index
    %c3_97 = arith.constant 3 : index
    %c0_98 = arith.constant 0 : index
    %c0_99 = arith.constant 0 : index
    %106 = vector.load %arg3[%c3_96, %c3_97, %c0_98, %c0_99] : memref<4x4x4x128xf32, #tpu.memory_space<vmem>>, vector<1x1x4x128xf32>
    %107 = vector.shape_cast %106 : vector<1x1x4x128xf32> to vector<4x128xf32>
    %cst_100 = arith.constant dense<0.000000e+00> : vector<8x128xf32>
    %108 = tpu.matmul %17, %107, %cst_100 {dimension_numbers = #tpu.dot_dimension_numbers<[1], [0], [0], [1], [0, 0, 1, 1], [], []>} : vector<8x4xf32>, vector<4x128xf32>, vector<8x128xf32> -> vector<8x128xf32>
    %109 = arith.addf %105, %108 : vector<8x128xf32>
    %110 = vector.broadcast %24 : vector<8x1xf32> to vector<8x128xf32>
    %111 = arith.mulf %109, %110 : vector<8x128xf32>
    %c0_101 = arith.constant 0 : index
    %c3_102 = arith.constant 3 : index
    %c0_103 = arith.constant 0 : index
    %112 = vector.load %arg4[%c0_101, %c3_102, %c0_103] : memref<1x16x128xf32, #tpu.memory_space<vmem>>, vector<1x8x128xf32>
    %113 = vector.shape_cast %112 : vector<1x8x128xf32> to vector<8x128xf32>
    %114 = arith.addf %113, %111 : vector<8x128xf32>
    %c0_104 = arith.constant 0 : index
    %c3_105 = arith.constant 3 : index
    %c0_106 = arith.constant 0 : index
    %115 = vector.load %arg4[%c0_104, %c3_105, %c0_106] : memref<1x16x128xf32, #tpu.memory_space<vmem>>, vector<1x8x128xf32>
    %116 = vector.shape_cast %115 : vector<1x8x128xf32> to vector<8x128xf32>
    %117 = vector.shape_cast %114 : vector<8x128xf32> to vector<1x8x128xf32>
    tpu.vector_store %arg4[%c0_104, %c3_105, %c0_106], %117 {strides = array<i32>} : memref<1x16x128xf32, #tpu.memory_space<vmem>>, vector<1x8x128xf32>,
    return
  }
  func.func @transform_0(%arg0: i32, %arg1: i32) -> (i32, i32, i32) {
    %c0_i32 = arith.constant 0 : i32
    %c0_i32_0 = arith.constant 0 : i32
    %c0_i32_1 = arith.constant 0 : i32
    return %arg0, %c0_i32, %c0_i32_0 : i32, i32, i32
  }
  func.func @transform_1(%arg0: i32, %arg1: i32) -> (i32, i32, i32, i32) {
    %c0_i32 = arith.constant 0 : i32
    %c0_i32_0 = arith.constant 0 : i32
    %c0_i32_1 = arith.constant 0 : i32
    %c0_i32_2 = arith.constant 0 : i32
    %c0_i32_3 = arith.constant 0 : i32
    return %c0_i32, %c0_i32_0, %c0_i32_1, %c0_i32_2 : i32, i32, i32, i32
  }
  func.func @transform_2(%arg0: i32, %arg1: i32) -> (i32, i32, i32) {
    %c0_i32 = arith.constant 0 : i32
    %c0_i32_0 = arith.constant 0 : i32
    return %arg0, %arg1, %c0_i32 : i32, i32, i32
  }
}

</mosaic_0001>

<llo_original>
// kernel: tpu_custom_call.1
$region0: #{tpu_custom_call.1}
  #allocation0 [shape = 'u32[]', space=smem, size = 0x4, offset = 0x4, fixed_abs, tag = 'smem constant byte address 0x4 - core index']
  #allocation1 [shape = 'u32[144,128]{1,0:T(1,128)}', space=vmem, size = 0x12000, scoped, tag = 'internal scratch']
  %s0 = inlined_call_operand.vmem [shape: f32[2,32,4], index: 0, kind: input, shape index: {}]
  %s1 = inlined_call_operand.vmem [shape: f32[4,4,4,128], index: 1, kind: input, shape index: {}]
  %s2 = inlined_call_operand.hbm [shape: f32[2,48,128], index: 2, kind: output, shape index: {}]
  %s3 = sld [smem:[#allocation0]]
  $region41: #{tpu_custom_call.1} parent=0
    _
  %s5 = ssub.s32 1, %s3
  %s6 = scalar_select 0, %s5, %s3
  $region1: #{tpu_custom_call.1} parent=0
    #allocation2 [shape = 'u8[16384]{0}', space=vmem, size = 0x4000, scoped, tag = 'output window, operand 0']
    #allocation3 [shape = 's32[2]{0}', space=sflag, size = 0x8, scoped, tag = 'scoped memory for tpu_custom_call.1']
    %7 = vsyncpa [#allocation3], 0
    %s8 = scalar_lea.sflag [#allocation3], 1
    %9 = vsyncpa %s8, 0
    loop: start=0, step=1, limit=8
    $region2: #{tpu_custom_call.1} parent=1 // loop_pre_header
      _
    $region3: #{tpu_custom_call.1} parent=1 // loop_header
      %s11 = sphi 0, %s15
      %p12 = scmp.ge.s32.totalorder %s11, 8
      %s18 = sphi 0, %s30
      %s19 = sphi 0, %s26
      %s20 = sphi 0, %s18
      %s21 = sphi 0, %s19
      %s22 = sphi 0, %s20
      %s23 = sphi 0, %s21
      %s33 = sphi 0, %s35
      %s36 = sphi 0, %s33
      %s37 = sphi 0, %s36
      %s53 = sphi 0, %s37
      %s57 = sphi 0, %s57
      %s59 = sphi 0, %s57
      %s60 = sphi 0, %s59
      %s74 = sphi 0, %s60
      %s82 = sphi 0, %s84
      %s85 = sphi 0, %s82
      %s86 = sphi 0, %s85
      %s102 = sphi 0, %s86
    $region4: #{tpu_custom_call.1} parent=1 // loop_header_branch
      %14 = sbr.rel (%p12) target = $region8
    $region5: #{tpu_custom_call.1} parent=1 // loop_body
      %s16 = ssub.s32 %s11, 1
      %s17 = ssub.s32 %s11, 2
      %s24 = sadd.s32 1, %s19
      %p25 = scmp.ge.s32.totalorder %s24, 3
      %s26 = scalar_select %p25, 0, %s24
      %s27 = sadd.s32 1, %s18
      %s28 = scalar_select %p25, %s27, %s18
      %p29 = scmp.ge.s32.totalorder %s28, 2
      %s30 = scalar_select %p29, 0, %s28
      %s31 = ssub.s32 %s18, %s30
      %p32 = scmp.eq.s32.totalorder %s31, 0
      %s34 = sadd.s32 %s33, 1
      %s35 = scalar_select %p32, %s33, %s34
      %p38 = pneg %p32
      %p39 = scmp.eq.s32.totalorder %s11, 5
      %p40 = por %p38, %p39
      %p41 = scmp.ne.s32.totalorder %s33, %s36
      %p42 = scmp.eq.s32.totalorder %s11, 0
      %p43 = por %p41, %p42
      %p44 = scmp.ne.s32.totalorder %s33, %s36
      %p45 = scmp.eq.s32.totalorder %s16, 5
      %p46 = por %p44, %p45
      %p47 = scmp.ne.s32.totalorder %s36, %s37
      %p48 = scmp.eq.s32.totalorder %s16, 0
      %p49 = por %p47, %p48
      %p50 = scmp.ne.s32.totalorder %s36, %s37
      %p51 = scmp.eq.s32.totalorder %s17, 5
      %p52 = por %p50, %p51
      %p54 = scmp.ne.s32.totalorder %s37, %s53
      %p55 = scmp.eq.s32.totalorder %s17, 0
      %p56 = por %p54, %p55
      %s58 = sadd.s32 %s57, 1
      %p61 = scmp.eq.s32.totalorder %s11, 5
      %p62 = scmp.ne.s32.totalorder %s57, %s59
      %p63 = scmp.eq.s32.totalorder %s11, 0
      %p64 = por %p62, %p63
      %p65 = scmp.ne.s32.totalorder %s57, %s59
      %p66 = scmp.eq.s32.totalorder %s16, 5
      %p67 = por %p65, %p66
      %p68 = scmp.ne.s32.totalorder %s59, %s60
      %p69 = scmp.eq.s32.totalorder %s16, 0
      %p70 = por %p68, %p69
      %p71 = scmp.ne.s32.totalorder %s59, %s60
      %p72 = scmp.eq.s32.totalorder %s17, 5
      %p73 = por %p71, %p72
      %p75 = scmp.ne.s32.totalorder %s60, %s74
      %p76 = scmp.eq.s32.totalorder %s17, 0
      %p77 = por %p75, %p76
      %s78 = ssub.s32 %s18, %s30
      %s79 = ssub.s32 %s19, %s26
      %s80 = sor.u32 %s78, %s79
      %p81 = scmp.eq.s32.totalorder %s80, 0
      %s83 = sadd.s32 %s82, 1
      %s84 = scalar_select %p81, %s82, %s83
      %p87 = pneg %p81
      %p88 = scmp.eq.s32.totalorder %s11, 5
      %p89 = por %p87, %p88
      %p90 = scmp.ne.s32.totalorder %s82, %s85
      %p91 = scmp.eq.s32.totalorder %s11, 0
      %p92 = por %p90, %p91
      %p93 = scmp.ne.s32.totalorder %s82, %s85
      %p94 = scmp.eq.s32.totalorder %s16, 5
      %p95 = por %p93, %p94
      %p96 = scmp.ne.s32.totalorder %s85, %s86
      %p97 = scmp.eq.s32.totalorder %s16, 0
      %p98 = por %p96, %p97
      %p99 = scmp.ne.s32.totalorder %s85, %s86
      %p100 = scmp.eq.s32.totalorder %s17, 5
      %p101 = por %p99, %p100
      %p103 = scmp.ne.s32.totalorder %s86, %s102
      %p104 = scmp.eq.s32.totalorder %s17, 0
      %p105 = por %p103, %p104
      %p106 = scmp.le.s32.totalorder 1, %s11
      %p107 = scmp.lt.s32.totalorder %s11, 7
      %p108 = pnand %p106, %p107
      %p109 = pneg %p108
      // Predicated region
      $region9: #{tpu_custom_call.1} parent=5 // pred_check
        _
      $region10: #{tpu_custom_call.1} parent=5 // pred_check_branch
        %111 = sbr.rel (%p108) target = $region12
      $region11: #{tpu_custom_call.1} parent=5 // pred_region
        %s112 = ssub.s32 %s11, 1
        // Predicated region
        $region13: #{tpu_custom_call.1} parent=11 // pred_check
          %p113 = pneg %p70
        $region14: #{tpu_custom_call.1} parent=11 // pred_check_branch
          %115 = sbr.rel (%p113) target = $region16
        $region15: #{tpu_custom_call.1} parent=11 // pred_region
          _
        $region16: #{tpu_custom_call.1} parent=11 // pred_fallthru
          _
      $region12: #{tpu_custom_call.1} parent=5 // pred_fallthru
        _
      %p116 = scmp.lt.s32.totalorder %s11, 6
      // Predicated region
      $region17: #{tpu_custom_call.1} parent=5 // pred_check
        %p117 = pneg %p116
      $region18: #{tpu_custom_call.1} parent=5 // pred_check_branch
        %119 = sbr.rel (%p117) target = $region20
      $region19: #{tpu_custom_call.1} parent=5 // pred_region
        // Predicated region
        $region21: #{tpu_custom_call.1} parent=19 // pred_check
          %p120 = pneg %p43
        $region22: #{tpu_custom_call.1} parent=19 // pred_check_branch
          %122 = sbr.rel (%p120) target = $region24
        $region23: #{tpu_custom_call.1} parent=19 // pred_region
          %p123 = scmp.lt.s32.totalorder %s18, 1
          %s124 = scalar_select %p123, %s18, 1
          %s125 = smul.addr %s124, 4
          %s126 = smul.addr %s125, 8
          %s127 = scalar_lea.vmem %s0, %s126
        $region24: #{tpu_custom_call.1} parent=19 // pred_fallthru
          _
      $region20: #{tpu_custom_call.1} parent=5 // pred_fallthru
        _
      %p128 = scmp.le.s32.totalorder 1, %s11
      %p129 = scmp.lt.s32.totalorder %s11, 7
      %p130 = pnand %p128, %p129
      %p131 = pneg %p130
      // Predicated region
      $region25: #{tpu_custom_call.1} parent=5 // pred_check
        _
      $region26: #{tpu_custom_call.1} parent=5 // pred_check_branch
        %133 = sbr.rel (%p130) target = $region28
      $region27: #{tpu_custom_call.1} parent=5 // pred_region
        %s134 = ssub.s32 %s11, 1
        %p135 = scmp.lt.s32.totalorder %s20, 1
        %s136 = scalar_select %p135, %s20, 1
        %s137 = smul.addr %s136, 4
        %s138 = smul.addr %s137, 8
        %s139 = scalar_lea.vmem %s0, %s138
        %p140 = pneg %p49
        %p141 = pneg %p46
        %p142 = pneg %p70
        %p143 = pneg %p67
        %p144 = pneg %p98
        %p145 = pneg %p95
        %s146 = sand.u32 %s85, 1
        %s147 = scalar_lea.sflag [#allocation3], %s146
        %s148 = sand.u32 %s85, 1
        %s149 = smul.addr %s148, 16
        %s150 = scalar_lea.vmem [#allocation2], %s149
        %p151 = scmp.lt.s32.totalorder %s20, 1
        %s152 = scalar_select %p151, %s20, 1
        %s153 = smul.addr %s152, 4
        %s154 = smul.addr %s153, 8
        %s155 = scalar_lea.vmem %s0, %s154
        %s156 = smul.u32 2, %s21
        %s157 = smul.u32 %s21, 8
        %s158 = scalar_lea.vmem %s155, %s157
        %v159 = vld [vmem:[%s158] sm:$0xff]
        %s160 = sadd.s32 %s157, 1
        %s161 = scalar_lea.vmem %s155, %s160
        %v162 = vld [vmem:[%s161] sm:$0xff]
        %s163 = sadd.s32 %s157, 2
        %s164 = scalar_lea.vmem %s155, %s163
        %v165 = vld [vmem:[%s164] sm:$0xff]
        %s166 = sadd.s32 %s157, 3
        %s167 = scalar_lea.vmem %s155, %s166
        %v168 = vld [vmem:[%s167] sm:$0xff]
        %v169 = vlaneseq
        %v170 = vshrl.u32 %v169, 7
        %v171 = vstv %s157
        %v172 = vadd.s32 %v170, %v171
        %vm173 = vcmp.lt.s32.totalorder %v172, 17
        %v174 = vsel %vm173, 1, 0
        %v175 = vcvt.s32.f32 %v174
        %v176 = vld [vmem:[%s1] sm:$0xf]
        %s177 = scalar_lea.vmem %s1, 16
        %v178 = vld [vmem:[%s177] sm:$0xf]
        %vm179 = vcmask 31744
        %v181 = vsel %vm179, %v162, 0
        %vm183 = vcmask 1043456
        %v185 = vsel %vm183, %v178, 0
        %187 = vmatprep.subr.mxu0 0.0
        %188 = vmatpush1.msra.mxu0 %v185
        %189 = vmatprep.subr.mxu0 0.0
        %190 = vmatpush1.msra.mxu0 0.0
        %191 = vmatprep.subr.mxu0 0.0
        %192 = vmatpush1.msra.mxu0 0.0
        %193 = vmatprep.subr.mxu0 0.0
        %194 = vmatpush1.msra.mxu0 0.0
        %195 = vmatprep.subr.mxu0 0.0
        %196 = vmatpush1.msra.mxu0 0.0
        %197 = vmatprep.subr.mxu0 0.0
        %198 = vmatpush1.msra.mxu0 0.0
        %199 = vmatprep.subr.mxu0 0.0
        %200 = vmatpush1.msra.mxu0 0.0
        %201 = vmatprep.subr.mxu0 0.0
        %202 = vmatpush1.msra.mxu0 0.0
        %203 = vmatprep.subr.mxu0 0.0
        %204 = vmatpush1.msra.mxu0 0.0
        %205 = vmatprep.subr.mxu0 0.0
        %206 = vmatpush1.msra.mxu0 0.0
        %207 = vmatprep.subr.mxu0 0.0
        %208 = vmatpush1.msra.mxu0 0.0
        %209 = vmatprep.subr.mxu0 0.0
        %210 = vmatpush1.msra.mxu0 0.0
        %211 = vmatprep.subr.mxu0 0.0
        %212 = vmatpush1.msra.mxu0 0.0
        %213 = vmatprep.subr.mxu0 0.0
        %214 = vmatpush1.msra.mxu0 0.0
        %215 = vmatprep.subr.mxu0 0.0
        %216 = vmatpush1.msra.mxu0 0.0
        %217 = vmatprep.subr.mxu0 0.0
        %218 = vmatpush1.msra.mxu0 0.0
        %219 = vmatprep.subr.mxu0 0.0
        %220 = vmatpush1.msra.mxu0 0.0
        %221 = vmatprep.subr.mxu0 0.0
        %222 = vmatpush1.msra.mxu0 0.0
        %223 = vmatprep.subr.mxu0 0.0
        %224 = vmatpush1.msra.mxu0 0.0
        %225 = vmatprep.subr.mxu0 0.0
        %226 = vmatpush1.msra.mxu0 0.0
        %227 = vmatprep.subr.mxu0 0.0
        %228 = vmatpush1.msra.mxu0 0.0
        %229 = vmatprep.subr.mxu0 0.0
        %230 = vmatpush1.msra.mxu0 0.0
        %231 = vmatprep.subr.mxu0 0.0
        %232 = vmatpush1.msra.mxu0 0.0
        %233 = vmatprep.subr.mxu0 0.0
        %234 = vmatpush1.msra.mxu0 0.0
        %235 = vmatprep.subr.mxu0 0.0
        %236 = vmatpush1.msra.mxu0 0.0
        %237 = vmatprep.subr.mxu0 0.0
        %238 = vmatpush1.msra.mxu0 0.0
        %239 = vmatprep.subr.mxu0 0.0
        %240 = vmatpush1.msra.mxu0 0.0
        %241 = vmatprep.subr.mxu0 0.0
        %242 = vmatpush1.msra.mxu0 0.0
        %243 = vmatprep.subr.mxu0 0.0
        %244 = vmatpush1.msra.mxu0 0.0
        %245 = vmatprep.subr.mxu0 0.0
        %246 = vmatpush1.msra.mxu0 0.0
        %247 = vmatprep.subr.mxu0 0.0
        %248 = vmatpush1.msra.mxu0 0.0
        %249 = vmatprep.subr.mxu0 0.0
        %250 = vmatpush1.msra.mxu0 0.0
        %251 = vmatprep.mubr.f32.mxu0 0.0
        %252 = vmatmul.mubr.f32.gmra.mrb[0].mxu0 %v181
        %v253 = vpop.f32.mrb[0].mxu0
        %v254 = vadd.f32 0.0, %v253
        %v255 = vpop.f32.mrb[0].mxu0
        %256 = vdwg.mxu0
        %v258 = vsel %vm179, %v159, 0
        %v261 = vsel %vm183, %v176, 0
        %263 = vmatprep.subr.mxu0 0.0
        %264 = vmatpush1.msra.mxu0 %v261
        %265 = vmatprep.subr.mxu0 0.0
        %266 = vmatpush1.msra.mxu0 0.0
        %267 = vmatprep.subr.mxu0 0.0
        %268 = vmatpush1.msra.mxu0 0.0
        %269 = vmatprep.subr.mxu0 0.0
        %270 = vmatpush1.msra.mxu0 0.0
        %271 = vmatprep.subr.mxu0 0.0
        %272 = vmatpush1.msra.mxu0 0.0
        %273 = vmatprep.subr.mxu0 0.0
        %274 = vmatpush1.msra.mxu0 0.0
        %275 = vmatprep.subr.mxu0 0.0
        %276 = vmatpush1.msra.mxu0 0.0
        %277 = vmatprep.subr.mxu0 0.0
        %278 = vmatpush1.msra.mxu0 0.0
        %279 = vmatprep.subr.mxu0 0.0
        %280 = vmatpush1.msra.mxu0 0.0
        %281 = vmatprep.subr.mxu0 0.0
        %282 = vmatpush1.msra.mxu0 0.0
        %283 = vmatprep.subr.mxu0 0.0
        %284 = vmatpush1.msra.mxu0 0.0
        %285 = vmatprep.subr.mxu0 0.0
        %286 = vmatpush1.msra.mxu0 0.0
        %287 = vmatprep.subr.mxu0 0.0
        %288 = vmatpush1.msra.mxu0 0.0
        %289 = vmatprep.subr.mxu0 0.0
        %290 = vmatpush1.msra.mxu0 0.0
        %291 = vmatprep.subr.mxu0 0.0
        %292 = vmatpush1.msra.mxu0 0.0
        %293 = vmatprep.subr.mxu0 0.0
        %294 = vmatpush1.msra.mxu0 0.0
        %295 = vmatprep.subr.mxu0 0.0
        %296 = vmatpush1.msra.mxu0 0.0
        %297 = vmatprep.subr.mxu0 0.0
        %298 = vmatpush1.msra.mxu0 0.0
        %299 = vmatprep.subr.mxu0 0.0
        %300 = vmatpush1.msra.mxu0 0.0
        %301 = vmatprep.subr.mxu0 0.0
        %302 = vmatpush1.msra.mxu0 0.0
        %303 = vmatprep.subr.mxu0 0.0
        %304 = vmatpush1.msra.mxu0 0.0
        %305 = vmatprep.subr.mxu0 0.0
        %306 = vmatpush1.msra.mxu0 0.0
        %307 = vmatprep.subr.mxu0 0.0
        %308 = vmatpush1.msra.mxu0 0.0
        %309 = vmatprep.subr.mxu0 0.0
        %310 = vmatpush1.msra.mxu0 0.0
        %311 = vmatprep.subr.mxu0 0.0
        %312 = vmatpush1.msra.mxu0 0.0
        %313 = vmatprep.subr.mxu0 0.0
        %314 = vmatpush1.msra.mxu0 0.0
        %315 = vmatprep.subr.mxu0 0.0
        %316 = vmatpush1.msra.mxu0 0.0
        %317 = vmatprep.subr.mxu0 0.0
        %318 = vmatpush1.msra.mxu0 0.0
        %319 = vmatprep.subr.mxu0 0.0
        %320 = vmatpush1.msra.mxu0 0.0
        %321 = vmatprep.subr.mxu0 0.0
        %322 = vmatpush1.msra.mxu0 0.0
        %323 = vmatprep.subr.mxu0 0.0
        %324 = vmatpush1.msra.mxu0 0.0
        %325 = vmatprep.subr.mxu0 0.0
        %326 = vmatpush1.msra.mxu0 0.0
        %327 = vmatprep.mubr.f32.mxu0 0.0
        %328 = vmatmul.mubr.f32.gmra.mrb[0].mxu0 %v258
        %v329 = vpop.f32.mrb[0].mxu0
        %v330 = vadd.f32 %v254, %v329
        %v331 = vpop.f32.mrb[0].mxu0
        %332 = vdwg.mxu0
        %s333 = scalar_lea.vmem %s1, 32
        %v334 = vld [vmem:[%s333] sm:$0xf]
        %v336 = vsel %vm179, %v165, 0
        %v339 = vsel %vm183, %v334, 0
        %341 = vmatprep.subr.mxu0 0.0
        %342 = vmatpush1.msra.mxu0 %v339
        %343 = vmatprep.subr.mxu0 0.0
        %344 = vmatpush1.msra.mxu0 0.0
        %345 = vmatprep.subr.mxu0 0.0
        %346 = vmatpush1.msra.mxu0 0.0
        %347 = vmatprep.subr.mxu0 0.0
        %348 = vmatpush1.msra.mxu0 0.0
        %349 = vmatprep.subr.mxu0 0.0
        %350 = vmatpush1.msra.mxu0 0.0
        %351 = vmatprep.subr.mxu0 0.0
        %352 = vmatpush1.msra.mxu0 0.0
        %353 = vmatprep.subr.mxu0 0.0
        %354 = vmatpush1.msra.mxu0 0.0
        %355 = vmatprep.subr.mxu0 0.0
        %356 = vmatpush1.msra.mxu0 0.0
        %357 = vmatprep.subr.mxu0 0.0
        %358 = vmatpush1.msra.mxu0 0.0
        %359 = vmatprep.subr.mxu0 0.0
        %360 = vmatpush1.msra.mxu0 0.0
        %361 = vmatprep.subr.mxu0 0.0
        %362 = vmatpush1.msra.mxu0 0.0
        %363 = vmatprep.subr.mxu0 0.0
        %364 = vmatpush1.msra.mxu0 0.0
        %365 = vmatprep.subr.mxu0 0.0
        %366 = vmatpush1.msra.mxu0 0.0
        %367 = vmatprep.subr.mxu0 0.0
        %368 = vmatpush1.msra.mxu0 0.0
        %369 = vmatprep.subr.mxu0 0.0
        %370 = vmatpush1.msra.mxu0 0.0
        %371 = vmatprep.subr.mxu0 0.0
        %372 = vmatpush1.msra.mxu0 0.0
        %373 = vmatprep.subr.mxu0 0.0
        %374 = vmatpush1.msra.mxu0 0.0
        %375 = vmatprep.subr.mxu0 0.0
        %376 = vmatpush1.msra.mxu0 0.0
        %377 = vmatprep.subr.mxu0 0.0
        %378 = vmatpush1.msra.mxu0 0.0
        %379 = vmatprep.subr.mxu0 0.0
        %380 = vmatpush1.msra.mxu0 0.0
        %381 = vmatprep.subr.mxu0 0.0
        %382 = vmatpush1.msra.mxu0 0.0
        %383 = vmatprep.subr.mxu0 0.0
        %384 = vmatpush1.msra.mxu0 0.0
        %385 = vmatprep.subr.mxu0 0.0
        %386 = vmatpush1.msra.mxu0 0.0
        %387 = vmatprep.subr.mxu0 0.0
        %388 = vmatpush1.msra.mxu0 0.0
        %389 = vmatprep.subr.mxu0 0.0
        %390 = vmatpush1.msra.mxu0 0.0
        %391 = vmatprep.subr.mxu0 0.0
        %392 = vmatpush1.msra.mxu0 0.0
        %393 = vmatprep.subr.mxu0 0.0
        %394 = vmatpush1.msra.mxu0 0.0
        %395 = vmatprep.subr.mxu0 0.0
        %396 = vmatpush1.msra.mxu0 0.0
        %397 = vmatprep.subr.mxu0 0.0
        %398 = vmatpush1.msra.mxu0 0.0
        %399 = vmatprep.subr.mxu0 0.0
        %400 = vmatpush1.msra.mxu0 0.0
        %401 = vmatprep.subr.mxu0 0.0
        %402 = vmatpush1.msra.mxu0 0.0
        %403 = vmatprep.subr.mxu0 0.0
        %404 = vmatpush1.msra.mxu0 0.0
        %405 = vmatprep.mubr.f32.mxu0 0.0
        %406 = vmatmul.mubr.f32.gmra.mrb[0].mxu0 %v336
        %v407 = vpop.f32.mrb[0].mxu0
        %v408 = vadd.f32 0.0, %v407
        %v409 = vpop.f32.mrb[0].mxu0
        %410 = vdwg.mxu0
        %v411 = vadd.f32 %v330, %v408
        %s412 = scalar_lea.vmem %s1, 48
        %v413 = vld [vmem:[%s412] sm:$0xf]
        %v415 = vsel %vm179, %v168, 0
        %v418 = vsel %vm183, %v413, 0
        %420 = vmatprep.subr.mxu0 0.0
        %421 = vmatpush1.msra.mxu0 %v418
        %422 = vmatprep.subr.mxu0 0.0
        %423 = vmatpush1.msra.mxu0 0.0
        %424 = vmatprep.subr.mxu0 0.0
        %425 = vmatpush1.msra.mxu0 0.0
        %426 = vmatprep.subr.mxu0 0.0
        %427 = vmatpush1.msra.mxu0 0.0
        %428 = vmatprep.subr.mxu0 0.0
        %429 = vmatpush1.msra.mxu0 0.0
        %430 = vmatprep.subr.mxu0 0.0
        %431 = vmatpush1.msra.mxu0 0.0
        %432 = vmatprep.subr.mxu0 0.0
        %433 = vmatpush1.msra.mxu0 0.0
        %434 = vmatprep.subr.mxu0 0.0
        %435 = vmatpush1.msra.mxu0 0.0
        %436 = vmatprep.subr.mxu0 0.0
        %437 = vmatpush1.msra.mxu0 0.0
        %438 = vmatprep.subr.mxu0 0.0
        %439 = vmatpush1.msra.mxu0 0.0
        %440 = vmatprep.subr.mxu0 0.0
        %441 = vmatpush1.msra.mxu0 0.0
        %442 = vmatprep.subr.mxu0 0.0
        %443 = vmatpush1.msra.mxu0 0.0
        %444 = vmatprep.subr.mxu0 0.0
        %445 = vmatpush1.msra.mxu0 0.0
        %446 = vmatprep.subr.mxu0 0.0
        %447 = vmatpush1.msra.mxu0 0.0
        %448 = vmatprep.subr.mxu0 0.0
        %449 = vmatpush1.msra.mxu0 0.0
        %450 = vmatprep.subr.mxu0 0.0
        %451 = vmatpush1.msra.mxu0 0.0
        %452 = vmatprep.subr.mxu0 0.0
        %453 = vmatpush1.msra.mxu0 0.0
        %454 = vmatprep.subr.mxu0 0.0
        %455 = vmatpush1.msra.mxu0 0.0
        %456 = vmatprep.subr.mxu0 0.0
        %457 = vmatpush1.msra.mxu0 0.0
        %458 = vmatprep.subr.mxu0 0.0
        %459 = vmatpush1.msra.mxu0 0.0
        %460 = vmatprep.subr.mxu0 0.0
        %461 = vmatpush1.msra.mxu0 0.0
        %462 = vmatprep.subr.mxu0 0.0
        %463 = vmatpush1.msra.mxu0 0.0
        %464 = vmatprep.subr.mxu0 0.0
        %465 = vmatpush1.msra.mxu0 0.0
        %466 = vmatprep.subr.mxu0 0.0
        %467 = vmatpush1.msra.mxu0 0.0
        %468 = vmatprep.subr.mxu0 0.0
        %469 = vmatpush1.msra.mxu0 0.0
        %470 = vmatprep.subr.mxu0 0.0
        %471 = vmatpush1.msra.mxu0 0.0
        %472 = vmatprep.subr.mxu0 0.0
        %473 = vmatpush1.msra.mxu0 0.0
        %474 = vmatprep.subr.mxu0 0.0
        %475 = vmatpush1.msra.mxu0 0.0
        %476 = vmatprep.subr.mxu0 0.0
        %477 = vmatpush1.msra.mxu0 0.0
        %478 = vmatprep.subr.mxu0 0.0
        %479 = vmatpush1.msra.mxu0 0.0
        %480 = vmatprep.subr.mxu0 0.0
        %481 = vmatpush1.msra.mxu0 0.0
        %482 = vmatprep.subr.mxu0 0.0
        %483 = vmatpush1.msra.mxu0 0.0
        %484 = vmatprep.mubr.f32.mxu0 0.0
        %485 = vmatmul.mubr.f32.gmra.mrb[0].mxu0 %v415
        %v486 = vpop.f32.mrb[0].mxu0
        %v487 = vadd.f32 0.0, %v486
        %v488 = vpop.f32.mrb[0].mxu0
        %489 = vdwg.mxu0
        %v490 = vadd.f32 %v411, %v487
        %v491 = vmul.f32 %v490, %v175
        %492 = vst [vmem:[%s150] sm:$0xff] %v491
        %493 = vst [vmem:[%s150 + $0x8] sm:$0xff] 0.0
        %s494 = scalar_lea.vmem %s1, 4
        %v495 = vld [vmem:[%s494] sm:$0xf]
        %s496 = scalar_lea.vmem %s1, 20
        %v497 = vld [vmem:[%s496] sm:$0xf]
        %v499 = vsel %vm183, %v497, 0
        %501 = vmatprep.subr.mxu0 0.0
        %502 = vmatpush1.msra.mxu0 %v499
        %503 = vmatprep.subr.mxu0 0.0
        %504 = vmatpush1.msra.mxu0 0.0
        %505 = vmatprep.subr.mxu0 0.0
        %506 = vmatpush1.msra.mxu0 0.0
        %507 = vmatprep.subr.mxu0 0.0
        %508 = vmatpush1.msra.mxu0 0.0
        %509 = vmatprep.subr.mxu0 0.0
        %510 = vmatpush1.msra.mxu0 0.0
        %511 = vmatprep.subr.mxu0 0.0
        %512 = vmatpush1.msra.mxu0 0.0
        %513 = vmatprep.subr.mxu0 0.0
        %514 = vmatpush1.msra.mxu0 0.0
        %515 = vmatprep.subr.mxu0 0.0
        %516 = vmatpush1.msra.mxu0 0.0
        %517 = vmatprep.subr.mxu0 0.0
        %518 = vmatpush1.msra.mxu0 0.0
        %519 = vmatprep.subr.mxu0 0.0
        %520 = vmatpush1.msra.mxu0 0.0
        %521 = vmatprep.subr.mxu0 0.0
        %522 = vmatpush1.msra.mxu0 0.0
        %523 = vmatprep.subr.mxu0 0.0
        %524 = vmatpush1.msra.mxu0 0.0
        %525 = vmatprep.subr.mxu0 0.0
        %526 = vmatpush1.msra.mxu0 0.0
        %527 = vmatprep.subr.mxu0 0.0
        %528 = vmatpush1.msra.mxu0 0.0
        %529 = vmatprep.subr.mxu0 0.0
        %530 = vmatpush1.msra.mxu0 0.0
        %531 = vmatprep.subr.mxu0 0.0
        %532 = vmatpush1.msra.mxu0 0.0
        %533 = vmatprep.subr.mxu0 0.0
        %534 = vmatpush1.msra.mxu0 0.0
        %535 = vmatprep.subr.mxu0 0.0
        %536 = vmatpush1.msra.mxu0 0.0
        %537 = vmatprep.subr.mxu0 0.0
        %538 = vmatpush1.msra.mxu0 0.0
        %539 = vmatprep.subr.mxu0 0.0
        %540 = vmatpush1.msra.mxu0 0.0
        %541 = vmatprep.subr.mxu0 0.0
        %542 = vmatpush1.msra.mxu0 0.0
        %543 = vmatprep.subr.mxu0 0.0
        %544 = vmatpush1.msra.mxu0 0.0
        %545 = vmatprep.subr.mxu0 0.0
        %546 = vmatpush1.msra.mxu0 0.0
        %547 = vmatprep.subr.mxu0 0.0
        %548 = vmatpush1.msra.mxu0 0.0
        %549 = vmatprep.subr.mxu0 0.0
        %550 = vmatpush1.msra.mxu0 0.0
        %551 = vmatprep.subr.mxu0 0.0
        %552 = vmatpush1.msra.mxu0 0.0
        %553 = vmatprep.subr.mxu0 0.0
        %554 = vmatpush1.msra.mxu0 0.0
        %555 = vmatprep.subr.mxu0 0.0
        %556 = vmatpush1.msra.mxu0 0.0
        %557 = vmatprep.subr.mxu0 0.0
        %558 = vmatpush1.msra.mxu0 0.0
        %559 = vmatprep.subr.mxu0 0.0
        %560 = vmatpush1.msra.mxu0 0.0
        %561 = vmatprep.subr.mxu0 0.0
        %562 = vmatpush1.msra.mxu0 0.0
        %563 = vmatprep.subr.mxu0 0.0
        %564 = vmatpush1.msra.mxu0 0.0
        %565 = vmatprep.mubr.f32.mxu0 0.0
        %566 = vmatmul.mubr.f32.gmra.mrb[0].mxu0 %v181
        %v567 = vpop.f32.mrb[0].mxu0
        %v568 = vadd.f32 0.0, %v567
        %v569 = vpop.f32.mrb[0].mxu0
        %570 = vdwg.mxu0
        %v572 = vsel %vm183, %v495, 0
        %574 = vmatprep.subr.mxu0 0.0
        %575 = vmatpush1.msra.mxu0 %v572
        %576 = vmatprep.subr.mxu0 0.0
        %577 = vmatpush1.msra.mxu0 0.0
        %578 = vmatprep.subr.mxu0 0.0
        %579 = vmatpush1.msra.mxu0 0.0
        %580 = vmatprep.subr.mxu0 0.0
        %581 = vmatpush1.msra.mxu0 0.0
        %582 = vmatprep.subr.mxu0 0.0
        %583 = vmatpush1.msra.mxu0 0.0
        %584 = vmatprep.subr.mxu0 0.0
        %585 = vmatpush1.msra.mxu0 0.0
        %586 = vmatprep.subr.mxu0 0.0
        %587 = vmatpush1.msra.mxu0 0.0
        %588 = vmatprep.subr.mxu0 0.0
        %589 = vmatpush1.msra.mxu0 0.0
        %590 = vmatprep.subr.mxu0 0.0
        %591 = vmatpush1.msra.mxu0 0.0
        %592 = vmatprep.subr.mxu0 0.0
        %593 = vmatpush1.msra.mxu0 0.0
        %594 = vmatprep.subr.mxu0 0.0
        %595 = vmatpush1.msra.mxu0 0.0
        %596 = vmatprep.subr.mxu0 0.0
        %597 = vmatpush1.msra.mxu0 0.0
        %598 = vmatprep.subr.mxu0 0.0
        %599 = vmatpush1.msra.mxu0 0.0
        %600 = vmatprep.subr.mxu0 0.0
        %601 = vmatpush1.msra.mxu0 0.0
        %602 = vmatprep.subr.mxu0 0.0
        %603 = vmatpush1.msra.mxu0 0.0
        %604 = vmatprep.subr.mxu0 0.0
        %605 = vmatpush1.msra.mxu0 0.0
        %606 = vmatprep.subr.mxu0 0.0
        %607 = vmatpush1.msra.mxu0 0.0
        %608 = vmatprep.subr.mxu0 0.0
        %609 = vmatpush1.msra.mxu0 0.0
        %610 = vmatprep.subr.mxu0 0.0
        %611 = vmatpush1.msra.mxu0 0.0
        %612 = vmatprep.subr.mxu0 0.0
        %613 = vmatpush1.msra.mxu0 0.0
        %614 = vmatprep.subr.mxu0 0.0
        %615 = vmatpush1.msra.mxu0 0.0
        %616 = vmatprep.subr.mxu0 0.0
        %617 = vmatpush1.msra.mxu0 0.0
        %618 = vmatprep.subr.mxu0 0.0
        %619 = vmatpush1.msra.mxu0 0.0
        %620 = vmatprep.subr.mxu0 0.0
        %621 = vmatpush1.msra.mxu0 0.0
        %622 = vmatprep.subr.mxu0 0.0
        %623 = vmatpush1.msra.mxu0 0.0
        %624 = vmatprep.subr.mxu0 0.0
        %625 = vmatpush1.msra.mxu0 0.0
        %626 = vmatprep.subr.mxu0 0.0
        %627 = vmatpush1.msra.mxu0 0.0
        %628 = vmatprep.subr.mxu0 0.0
        %629 = vmatpush1.msra.mxu0 0.0
        %630 = vmatprep.subr.mxu0 0.0
        %631 = vmatpush1.msra.mxu0 0.0
        %632 = vmatprep.subr.mxu0 0.0
        %633 = vmatpush1.msra.mxu0 0.0
        %634 = vmatprep.subr.mxu0 0.0
        %635 = vmatpush1.msra.mxu0 0.0
        %636 = vmatprep.subr.mxu0 0.0
        %637 = vmatpush1.msra.mxu0 0.0
        %638 = vmatprep.mubr.f32.mxu0 0.0
        %639 = vmatmul.mubr.f32.gmra.mrb[0].mxu0 %v258
        %v640 = vpop.f32.mrb[0].mxu0
        %v641 = vadd.f32 %v568, %v640
        %v642 = vpop.f32.mrb[0].mxu0
        %643 = vdwg.mxu0
        %s644 = scalar_lea.vmem %s1, 36
        %v645 = vld [vmem:[%s644] sm:$0xf]
        %v647 = vsel %vm183, %v645, 0
        %649 = vmatprep.subr.mxu0 0.0
        %650 = vmatpush1.msra.mxu0 %v647
        %651 = vmatprep.subr.mxu0 0.0
        %652 = vmatpush1.msra.mxu0 0.0
        %653 = vmatprep.subr.mxu0 0.0
        %654 = vmatpush1.msra.mxu0 0.0
        %655 = vmatprep.subr.mxu0 0.0
        %656 = vmatpush1.msra.mxu0 0.0
        %657 = vmatprep.subr.mxu0 0.0
        %658 = vmatpush1.msra.mxu0 0.0
        %659 = vmatprep.subr.mxu0 0.0
        %660 = vmatpush1.msra.mxu0 0.0
        %661 = vmatprep.subr.mxu0 0.0
        %662 = vmatpush1.msra.mxu0 0.0
        %663 = vmatprep.subr.mxu0 0.0
        %664 = vmatpush1.msra.mxu0 0.0
        %665 = vmatprep.subr.mxu0 0.0
        %666 = vmatpush1.msra.mxu0 0.0
        %667 = vmatprep.subr.mxu0 0.0
        %668 = vmatpush1.msra.mxu0 0.0
        %669 = vmatprep.subr.mxu0 0.0
        %670 = vmatpush1.msra.mxu0 0.0
        %671 = vmatprep.subr.mxu0 0.0
        %672 = vmatpush1.msra.mxu0 0.0
        %673 = vmatprep.subr.mxu0 0.0
        %674 = vmatpush1.msra.mxu0 0.0
        %675 = vmatprep.subr.mxu0 0.0
        %676 = vmatpush1.msra.mxu0 0.0
        %677 = vmatprep.subr.mxu0 0.0
        %678 = vmatpush1.msra.mxu0 0.0
        %679 = vmatprep.subr.mxu0 0.0
        %680 = vmatpush1.msra.mxu0 0.0
        %681 = vmatprep.subr.mxu0 0.0
        %682 = vmatpush1.msra.mxu0 0.0
        %683 = vmatprep.subr.mxu0 0.0
        %684 = vmatpush1.msra.mxu0 0.0
        %685 = vmatprep.subr.mxu0 0.0
        %686 = vmatpush1.msra.mxu0 0.0
        %687 = vmatprep.subr.mxu0 0.0
        %688 = vmatpush1.msra.mxu0 0.0
        %689 = vmatprep.subr.mxu0 0.0
        %690 = vmatpush1.msra.mxu0 0.0
        %691 = vmatprep.subr.mxu0 0.0
        %692 = vmatpush1.msra.mxu0 0.0
        %693 = vmatprep.subr.mxu0 0.0
        %694 = vmatpush1.msra.mxu0 0.0
        %695 = vmatprep.subr.mxu0 0.0
        %696 = vmatpush1.msra.mxu0 0.0
        %697 = vmatprep.subr.mxu0 0.0
        %698 = vmatpush1.msra.mxu0 0.0
        %699 = vmatprep.subr.mxu0 0.0
        %700 = vmatpush1.msra.mxu0 0.0
        %701 = vmatprep.subr.mxu0 0.0
        %702 = vmatpush1.msra.mxu0 0.0
        %703 = vmatprep.subr.mxu0 0.0
        %704 = vmatpush1.msra.mxu0 0.0
        %705 = vmatprep.subr.mxu0 0.0
        %706 = vmatpush1.msra.mxu0 0.0
        %707 = vmatprep.subr.mxu0 0.0
        %708 = vmatpush1.msra.mxu0 0.0
        %709 = vmatprep.subr.mxu0 0.0
        %710 = vmatpush1.msra.mxu0 0.0
        %711 = vmatprep.subr.mxu0 0.0
        %712 = vmatpush1.msra.mxu0 0.0
        %713 = vmatprep.mubr.f32.mxu0 0.0
        %714 = vmatmul.mubr.f32.gmra.mrb[0].mxu0 %v336
        %v715 = vpop.f32.mrb[0].mxu0
        %v716 = vadd.f32 0.0, %v715
        %v717 = vpop.f32.mrb[0].mxu0
        %718 = vdwg.mxu0
        %v719 = vadd.f32 %v641, %v716
        %s720 = scalar_lea.vmem %s1, 52
        %v721 = vld [vmem:[%s720] sm:$0xf]
        %v723 = vsel %vm183, %v721, 0
        %725 = vmatprep.subr.mxu0 0.0
        %726 = vmatpush1.msra.mxu0 %v723
        %727 = vmatprep.subr.mxu0 0.0
        %728 = vmatpush1.msra.mxu0 0.0
        %729 = vmatprep.subr.mxu0 0.0
        %730 = vmatpush1.msra.mxu0 0.0
        %731 = vmatprep.subr.mxu0 0.0
        %732 = vmatpush1.msra.mxu0 0.0
        %733 = vmatprep.subr.mxu0 0.0
        %734 = vmatpush1.msra.mxu0 0.0
        %735 = vmatprep.subr.mxu0 0.0
        %736 = vmatpush1.msra.mxu0 0.0
        %737 = vmatprep.subr.mxu0 0.0
        %738 = vmatpush1.msra.mxu0 0.0
        %739 = vmatprep.subr.mxu0 0.0
        %740 = vmatpush1.msra.mxu0 0.0
        %741 = vmatprep.subr.mxu0 0.0
        %742 = vmatpush1.msra.mxu0 0.0
        %743 = vmatprep.subr.mxu0 0.0
        %744 = vmatpush1.msra.mxu0 0.0
        %745 = vmatprep.subr.mxu0 0.0
        %746 = vmatpush1.msra.mxu0 0.0
        %747 = vmatprep.subr.mxu0 0.0
        %748 = vmatpush1.msra.mxu0 0.0
        %749 = vmatprep.subr.mxu0 0.0
        %750 = vmatpush1.msra.mxu0 0.0
        %751 = vmatprep.subr.mxu0 0.0
        %752 = vmatpush1.msra.mxu0 0.0
        %753 = vmatprep.subr.mxu0 0.0
        %754 = vmatpush1.msra.mxu0 0.0
        %755 = vmatprep.subr.mxu0 0.0
        %756 = vmatpush1.msra.mxu0 0.0
        %757 = vmatprep.subr.mxu0 0.0
        %758 = vmatpush1.msra.mxu0 0.0
        %759 = vmatprep.subr.mxu0 0.0
        %760 = vmatpush1.msra.mxu0 0.0
        %761 = vmatprep.subr.mxu0 0.0
        %762 = vmatpush1.msra.mxu0 0.0
        %763 = vmatprep.subr.mxu0 0.0
        %764 = vmatpush1.msra.mxu0 0.0
        %765 = vmatprep.subr.mxu0 0.0
        %766 = vmatpush1.msra.mxu0 0.0
        %767 = vmatprep.subr.mxu0 0.0
        %768 = vmatpush1.msra.mxu0 0.0
        %769 = vmatprep.subr.mxu0 0.0
        %770 = vmatpush1.msra.mxu0 0.0
        %771 = vmatprep.subr.mxu0 0.0
        %772 = vmatpush1.msra.mxu0 0.0
        %773 = vmatprep.subr.mxu0 0.0
        %774 = vmatpush1.msra.mxu0 0.0
        %775 = vmatprep.subr.mxu0 0.0
        %776 = vmatpush1.msra.mxu0 0.0
        %777 = vmatprep.subr.mxu0 0.0
        %778 = vmatpush1.msra.mxu0 0.0
        %779 = vmatprep.subr.mxu0 0.0
        %780 = vmatpush1.msra.mxu0 0.0
        %781 = vmatprep.subr.mxu0 0.0
        %782 = vmatpush1.msra.mxu0 0.0
        %783 = vmatprep.subr.mxu0 0.0
        %784 = vmatpush1.msra.mxu0 0.0
        %785 = vmatprep.subr.mxu0 0.0
        %786 = vmatpush1.msra.mxu0 0.0
        %787 = vmatprep.subr.mxu0 0.0
        %788 = vmatpush1.msra.mxu0 0.0
        %789 = vmatprep.mubr.f32.mxu0 0.0
        %790 = vmatmul.mubr.f32.gmra.mrb[0].mxu0 %v415
        %v791 = vpop.f32.mrb[0].mxu0
        %v792 = vadd.f32 0.0, %v791
        %v793 = vpop.f32.mrb[0].mxu0
        %794 = vdwg.mxu0
        %v795 = vadd.f32 %v719, %v792
        %v796 = vmul.f32 %v795, %v175
        %v797 = vld [vmem:[%s150 + $0x1] sm:$0xff]
        %v798 = vadd.f32 %v797, %v796
        %799 = vst [vmem:[%s150 + $0x1] sm:$0xff] %v798
        %s800 = scalar_lea.vmem %s1, 8
        %v801 = vld [vmem:[%s800] sm:$0xf]
        %s802 = scalar_lea.vmem %s1, 24
        %v803 = vld [vmem:[%s802] sm:$0xf]
        %v805 = vsel %vm183, %v803, 0
        %807 = vmatprep.subr.mxu0 0.0
        %808 = vmatpush1.msra.mxu0 %v805
        %809 = vmatprep.subr.mxu0 0.0
        %810 = vmatpush1.msra.mxu0 0.0
        %811 = vmatprep.subr.mxu0 0.0
        %812 = vmatpush1.msra.mxu0 0.0
        %813 = vmatprep.subr.mxu0 0.0
        %814 = vmatpush1.msra.mxu0 0.0
        %815 = vmatprep.subr.mxu0 0.0
        %816 = vmatpush1.msra.mxu0 0.0
        %817 = vmatprep.subr.mxu0 0.0
        %818 = vmatpush1.msra.mxu0 0.0
        %819 = vmatprep.subr.mxu0 0.0
        %820 = vmatpush1.msra.mxu0 0.0
        %821 = vmatprep.subr.mxu0 0.0
        %822 = vmatpush1.msra.mxu0 0.0
        %823 = vmatprep.subr.mxu0 0.0
        %824 = vmatpush1.msra.mxu0 0.0
        %825 = vmatprep.subr.mxu0 0.0
        %826 = vmatpush1.msra.mxu0 0.0
        %827 = vmatprep.subr.mxu0 0.0
        %828 = vmatpush1.msra.mxu0 0.0
        %829 = vmatprep.subr.mxu0 0.0
        %830 = vmatpush1.msra.mxu0 0.0
        %831 = vmatprep.subr.mxu0 0.0
        %832 = vmatpush1.msra.mxu0 0.0
        %833 = vmatprep.subr.mxu0 0.0
        %834 = vmatpush1.msra.mxu0 0.0
        %835 = vmatprep.subr.mxu0 0.0
        %836 = vmatpush1.msra.mxu0 0.0
        %837 = vmatprep.subr.mxu0 0.0
        %838 = vmatpush1.msra.mxu0 0.0
        %839 = vmatprep.subr.mxu0 0.0
        %840 = vmatpush1.msra.mxu0 0.0
        %841 = vmatprep.subr.mxu0 0.0
        %842 = vmatpush1.msra.mxu0 0.0
        %843 = vmatprep.subr.mxu0 0.0
        %844 = vmatpush1.msra.mxu0 0.0
        %845 = vmatprep.subr.mxu0 0.0
        %846 = vmatpush1.msra.mxu0 0.0
        %847 = vmatprep.subr.mxu0 0.0
        %848 = vmatpush1.msra.mxu0 0.0
        %849 = vmatprep.subr.mxu0 0.0
        %850 = vmatpush1.msra.mxu0 0.0
        %851 = vmatprep.subr.mxu0 0.0
        %852 = vmatpush1.msra.mxu0 0.0
        %853 = vmatprep.subr.mxu0 0.0
        %854 = vmatpush1.msra.mxu0 0.0
        %855 = vmatprep.subr.mxu0 0.0
        %856 = vmatpush1.msra.mxu0 0.0
        %857 = vmatprep.subr.mxu0 0.0
        %858 = vmatpush1.msra.mxu0 0.0
        %859 = vmatprep.subr.mxu0 0.0
        %860 = vmatpush1.msra.mxu0 0.0
        %861 = vmatprep.subr.mxu0 0.0
        %862 = vmatpush1.msra.mxu0 0.0
        %863 = vmatprep.subr.mxu0 0.0
        %864 = vmatpush1.msra.mxu0 0.0
        %865 = vmatprep.subr.mxu0 0.0
        %866 = vmatpush1.msra.mxu0 0.0
        %867 = vmatprep.subr.mxu0 0.0
        %868 = vmatpush1.msra.mxu0 0.0
        %869 = vmatprep.subr.mxu0 0.0
        %870 = vmatpush1.msra.mxu0 0.0
        %871 = vmatprep.mubr.f32.mxu0 0.0
        %872 = vmatmul.mubr.f32.gmra.mrb[0].mxu0 %v181
        %v873 = vpop.f32.mrb[0].mxu0
        %v874 = vadd.f32 0.0, %v873
        %v875 = vpop.f32.mrb[0].mxu0
        %876 = vdwg.mxu0
        %v878 = vsel %vm183, %v801, 0
        %880 = vmatprep.subr.mxu0 0.0
        %881 = vmatpush1.msra.mxu0 %v878
        %882 = vmatprep.subr.mxu0 0.0
        %883 = vmatpush1.msra.mxu0 0.0
        %884 = vmatprep.subr.mxu0 0.0
        %885 = vmatpush1.msra.mxu0 0.0
        %886 = vmatprep.subr.mxu0 0.0
        %887 = vmatpush1.msra.mxu0 0.0
        %888 = vmatprep.subr.mxu0 0.0
        %889 = vmatpush1.msra.mxu0 0.0
        %890 = vmatprep.subr.mxu0 0.0
        %891 = vmatpush1.msra.mxu0 0.0
        %892 = vmatprep.subr.mxu0 0.0
        %893 = vmatpush1.msra.mxu0 0.0
        %894 = vmatprep.subr.mxu0 0.0
        %895 = vmatpush1.msra.mxu0 0.0
        %896 = vmatprep.subr.mxu0 0.0
        %897 = vmatpush1.msra.mxu0 0.0
        %898 = vmatprep.subr.mxu0 0.0
        %899 = vmatpush1.msra.mxu0 0.0
        %900 = vmatprep.subr.mxu0 0.0
        %901 = vmatpush1.msra.mxu0 0.0
        %902 = vmatprep.subr.mxu0 0.0
        %903 = vmatpush1.msra.mxu0 0.0
        %904 = vmatprep.subr.mxu0 0.0
        %905 = vmatpush1.msra.mxu0 0.0
        %906 = vmatprep.subr.mxu0 0.0
        %907 = vmatpush1.msra.mxu0 0.0
        %908 = vmatprep.subr.mxu0 0.0
        %909 = vmatpush1.msra.mxu0 0.0
        %910 = vmatprep.subr.mxu0 0.0
        %911 = vmatpush1.msra.mxu0 0.0
        %912 = vmatprep.subr.mxu0 0.0
        %913 = vmatpush1.msra.mxu0 0.0
        %914 = vmatprep.subr.mxu0 0.0
        %915 = vmatpush1.msra.mxu0 0.0
        %916 = vmatprep.subr.mxu0 0.0
        %917 = vmatpush1.msra.mxu0 0.0
        %918 = vmatprep.subr.mxu0 0.0
        %919 = vmatpush1.msra.mxu0 0.0
        %920 = vmatprep.subr.mxu0 0.0
        %921 = vmatpush1.msra.mxu0 0.0
        %922 = vmatprep.subr.mxu0 0.0
        %923 = vmatpush1.msra.mxu0 0.0
        %924 = vmatprep.subr.mxu0 0.0
        %925 = vmatpush1.msra.mxu0 0.0
        %926 = vmatprep.subr.mxu0 0.0
        %927 = vmatpush1.msra.mxu0 0.0
        %928 = vmatprep.subr.mxu0 0.0
        %929 = vmatpush1.msra.mxu0 0.0
        %930 = vmatprep.subr.mxu0 0.0
        %931 = vmatpush1.msra.mxu0 0.0
        %932 = vmatprep.subr.mxu0 0.0
        %933 = vmatpush1.msra.mxu0 0.0
        %934 = vmatprep.subr.mxu0 0.0
        %935 = vmatpush1.msra.mxu0 0.0
        %936 = vmatprep.subr.mxu0 0.0
        %937 = vmatpush1.msra.mxu0 0.0
        %938 = vmatprep.subr.mxu0 0.0
        %939 = vmatpush1.msra.mxu0 0.0
        %940 = vmatprep.subr.mxu0 0.0
        %941 = vmatpush1.msra.mxu0 0.0
        %942 = vmatprep.subr.mxu0 0.0
        %943 = vmatpush1.msra.mxu0 0.0
        %944 = vmatprep.mubr.f32.mxu0 0.0
        %945 = vmatmul.mubr.f32.gmra.mrb[0].mxu0 %v258
        %v946 = vpop.f32.mrb[0].mxu0
        %v947 = vadd.f32 %v874, %v946
        %v948 = vpop.f32.mrb[0].mxu0
        %949 = vdwg.mxu0
        %s950 = scalar_lea.vmem %s1, 40
        %v951 = vld [vmem:[%s950] sm:$0xf]
        %v953 = vsel %vm183, %v951, 0
        %955 = vmatprep.subr.mxu0 0.0
        %956 = vmatpush1.msra.mxu0 %v953
        %957 = vmatprep.subr.mxu0 0.0
        %958 = vmatpush1.msra.mxu0 0.0
        %959 = vmatprep.subr.mxu0 0.0
        %960 = vmatpush1.msra.mxu0 0.0
        %961 = vmatprep.subr.mxu0 0.0
        %962 = vmatpush1.msra.mxu0 0.0
        %963 = vmatprep.subr.mxu0 0.0
        %964 = vmatpush1.msra.mxu0 0.0
        %965 = vmatprep.subr.mxu0 0.0
        %966 = vmatpush1.msra.mxu0 0.0
        %967 = vmatprep.subr.mxu0 0.0
        %968 = vmatpush1.msra.mxu0 0.0
        %969 = vmatprep.subr.mxu0 0.0
        %970 = vmatpush1.msra.mxu0 0.0
        %971 = vmatprep.subr.mxu0 0.0
        %972 = vmatpush1.msra.mxu0 0.0
        %973 = vmatprep.subr.mxu0 0.0
        %974 = vmatpush1.msra.mxu0 0.0
        %975 = vmatprep.subr.mxu0 0.0
        %976 = vmatpush1.msra.mxu0 0.0
        %977 = vmatprep.subr.mxu0 0.0
        %978 = vmatpush1.msra.mxu0 0.0
        %979 = vmatprep.subr.mxu0 0.0
        %980 = vmatpush1.msra.mxu0 0.0
        %981 = vmatprep.subr.mxu0 0.0
        %982 = vmatpush1.msra.mxu0 0.0
        %983 = vmatprep.subr.mxu0 0.0
        %984 = vmatpush1.msra.mxu0 0.0
        %985 = vmatprep.subr.mxu0 0.0
        %986 = vmatpush1.msra.mxu0 0.0
        %987 = vmatprep.subr.mxu0 0.0
        %988 = vmatpush1.msra.mxu0 0.0
        %989 = vmatprep.subr.mxu0 0.0
        %990 = vmatpush1.msra.mxu0 0.0
        %991 = vmatprep.subr.mxu0 0.0
        %992 = vmatpush1.msra.mxu0 0.0
        %993 = vmatprep.subr.mxu0 0.0
        %994 = vmatpush1.msra.mxu0 0.0
        %995 = vmatprep.subr.mxu0 0.0
        %996 = vmatpush1.msra.mxu0 0.0
        %997 = vmatprep.subr.mxu0 0.0
        %998 = vmatpush1.msra.mxu0 0.0
        %999 = vmatprep.subr.mxu0 0.0
        %1000 = vmatpush1.msra.mxu0 0.0
        %1001 = vmatprep.subr.mxu0 0.0
        %1002 = vmatpush1.msra.mxu0 0.0
        %1003 = vmatprep.subr.mxu0 0.0
        %1004 = vmatpush1.msra.mxu0 0.0
        %1005 = vmatprep.subr.mxu0 0.0
        %1006 = vmatpush1.msra.mxu0 0.0
        %1007 = vmatprep.subr.mxu0 0.0
        %1008 = vmatpush1.msra.mxu0 0.0
        %1009 = vmatprep.subr.mxu0 0.0
        %1010 = vmatpush1.msra.mxu0 0.0
        %1011 = vmatprep.subr.mxu0 0.0
        %1012 = vmatpush1.msra.mxu0 0.0
        %1013 = vmatprep.subr.mxu0 0.0
        %1014 = vmatpush1.msra.mxu0 0.0
        %1015 = vmatprep.subr.mxu0 0.0
        %1016 = vmatpush1.msra.mxu0 0.0
        %1017 = vmatprep.subr.mxu0 0.0
        %1018 = vmatpush1.msra.mxu0 0.0
        %1019 = vmatprep.mubr.f32.mxu0 0.0
        %1020 = vmatmul.mubr.f32.gmra.mrb[0].mxu0 %v336
        %v1021 = vpop.f32.mrb[0].mxu0
        %v1022 = vadd.f32 0.0, %v1021
        %v1023 = vpop.f32.mrb[0].mxu0
        %1024 = vdwg.mxu0
        %v1025 = vadd.f32 %v947, %v1022
        %s1026 = scalar_lea.vmem %s1, 56
        %v1027 = vld [vmem:[%s1026] sm:$0xf]
        %v1029 = vsel %vm183, %v1027, 0
        %1031 = vmatprep.subr.mxu0 0.0
        %1032 = vmatpush1.msra.mxu0 %v1029
        %1033 = vmatprep.subr.mxu0 0.0
        %1034 = vmatpush1.msra.mxu0 0.0
        %1035 = vmatprep.subr.mxu0 0.0
        %1036 = vmatpush1.msra.mxu0 0.0
        %1037 = vmatprep.subr.mxu0 0.0
        %1038 = vmatpush1.msra.mxu0 0.0
        %1039 = vmatprep.subr.mxu0 0.0
        %1040 = vmatpush1.msra.mxu0 0.0
        %1041 = vmatprep.subr.mxu0 0.0
        %1042 = vmatpush1.msra.mxu0 0.0
        %1043 = vmatprep.subr.mxu0 0.0
        %1044 = vmatpush1.msra.mxu0 0.0
        %1045 = vmatprep.subr.mxu0 0.0
        %1046 = vmatpush1.msra.mxu0 0.0
        %1047 = vmatprep.subr.mxu0 0.0
        %1048 = vmatpush1.msra.mxu0 0.0
        %1049 = vmatprep.subr.mxu0 0.0
        %1050 = vmatpush1.msra.mxu0 0.0
        %1051 = vmatprep.subr.mxu0 0.0
        %1052 = vmatpush1.msra.mxu0 0.0
        %1053 = vmatprep.subr.mxu0 0.0
        %1054 = vmatpush1.msra.mxu0 0.0
        %1055 = vmatprep.subr.mxu0 0.0
        %1056 = vmatpush1.msra.mxu0 0.0
        %1057 = vmatprep.subr.mxu0 0.0
        %1058 = vmatpush1.msra.mxu0 0.0
        %1059 = vmatprep.subr.mxu0 0.0
        %1060 = vmatpush1.msra.mxu0 0.0
        %1061 = vmatprep.subr.mxu0 0.0
        %1062 = vmatpush1.msra.mxu0 0.0
        %1063 = vmatprep.subr.mxu0 0.0
        %1064 = vmatpush1.msra.mxu0 0.0
        %1065 = vmatprep.subr.mxu0 0.0
        %1066 = vmatpush1.msra.mxu0 0.0
        %1067 = vmatprep.subr.mxu0 0.0
        %1068 = vmatpush1.msra.mxu0 0.0
        %1069 = vmatprep.subr.mxu0 0.0
        %1070 = vmatpush1.msra.mxu0 0.0
        %1071 = vmatprep.subr.mxu0 0.0
        %1072 = vmatpush1.msra.mxu0 0.0
        %1073 = vmatprep.subr.mxu0 0.0
        %1074 = vmatpush1.msra.mxu0 0.0
        %1075 = vmatprep.subr.mxu0 0.0
        %1076 = vmatpush1.msra.mxu0 0.0
        %1077 = vmatprep.subr.mxu0 0.0
        %1078 = vmatpush1.msra.mxu0 0.0
        %1079 = vmatprep.subr.mxu0 0.0
        %1080 = vmatpush1.msra.mxu0 0.0
        %1081 = vmatprep.subr.mxu0 0.0
        %1082 = vmatpush1.msra.mxu0 0.0
        %1083 = vmatprep.subr.mxu0 0.0
        %1084 = vmatpush1.msra.mxu0 0.0
        %1085 = vmatprep.subr.mxu0 0.0
        %1086 = vmatpush1.msra.mxu0 0.0
        %1087 = vmatprep.subr.mxu0 0.0
        %1088 = vmatpush1.msra.mxu0 0.0
        %1089 = vmatprep.subr.mxu0 0.0
        %1090 = vmatpush1.msra.mxu0 0.0
        %1091 = vmatprep.subr.mxu0 0.0
        %1092 = vmatpush1.msra.mxu0 0.0
        %1093 = vmatprep.subr.mxu0 0.0
        %1094 = vmatpush1.msra.mxu0 0.0
        %1095 = vmatprep.mubr.f32.mxu0 0.0
        %1096 = vmatmul.mubr.f32.gmra.mrb[0].mxu0 %v415
        %v1097 = vpop.f32.mrb[0].mxu0
        %v1098 = vadd.f32 0.0, %v1097
        %v1099 = vpop.f32.mrb[0].mxu0
        %1100 = vdwg.mxu0
        %v1101 = vadd.f32 %v1025, %v1098
        %v1102 = vmul.f32 %v1101, %v175
        %v1103 = vld [vmem:[%s150 + $0x2] sm:$0xff]
        %v1104 = vadd.f32 %v1103, %v1102
        %1105 = vst [vmem:[%s150 + $0x2] sm:$0xff] %v1104
        %s1106 = scalar_lea.vmem %s1, 12
        %v1107 = vld [vmem:[%s1106] sm:$0xf]
        %s1108 = scalar_lea.vmem %s1, 28
        %v1109 = vld [vmem:[%s1108] sm:$0xf]
        %v1111 = vsel %vm183, %v1109, 0
        %1113 = vmatprep.subr.mxu0 0.0
        %1114 = vmatpush1.msra.mxu0 %v1111
        %1115 = vmatprep.subr.mxu0 0.0
        %1116 = vmatpush1.msra.mxu0 0.0
        %1117 = vmatprep.subr.mxu0 0.0
        %1118 = vmatpush1.msra.mxu0 0.0
        %1119 = vmatprep.subr.mxu0 0.0
        %1120 = vmatpush1.msra.mxu0 0.0
        %1121 = vmatprep.subr.mxu0 0.0
        %1122 = vmatpush1.msra.mxu0 0.0
        %1123 = vmatprep.subr.mxu0 0.0
        %1124 = vmatpush1.msra.mxu0 0.0
        %1125 = vmatprep.subr.mxu0 0.0
        %1126 = vmatpush1.msra.mxu0 0.0
        %1127 = vmatprep.subr.mxu0 0.0
        %1128 = vmatpush1.msra.mxu0 0.0
        %1129 = vmatprep.subr.mxu0 0.0
        %1130 = vmatpush1.msra.mxu0 0.0
        %1131 = vmatprep.subr.mxu0 0.0
        %1132 = vmatpush1.msra.mxu0 0.0
        %1133 = vmatprep.subr.mxu0 0.0
        %1134 = vmatpush1.msra.mxu0 0.0
        %1135 = vmatprep.subr.mxu0 0.0
        %1136 = vmatpush1.msra.mxu0 0.0
        %1137 = vmatprep.subr.mxu0 0.0
        %1138 = vmatpush1.msra.mxu0 0.0
        %1139 = vmatprep.subr.mxu0 0.0
        %1140 = vmatpush1.msra.mxu0 0.0
        %1141 = vmatprep.subr.mxu0 0.0
        %1142 = vmatpush1.msra.mxu0 0.0
        %1143 = vmatprep.subr.mxu0 0.0
        %1144 = vmatpush1.msra.mxu0 0.0
        %1145 = vmatprep.subr.mxu0 0.0
        %1146 = vmatpush1.msra.mxu0 0.0
        %1147 = vmatprep.subr.mxu0 0.0
        %1148 = vmatpush1.msra.mxu0 0.0
        %1149 = vmatprep.subr.mxu0 0.0
        %1150 = vmatpush1.msra.mxu0 0.0
        %1151 = vmatprep.subr.mxu0 0.0
        %1152 = vmatpush1.msra.mxu0 0.0
        %1153 = vmatprep.subr.mxu0 0.0
        %1154 = vmatpush1.msra.mxu0 0.0
        %1155 = vmatprep.subr.mxu0 0.0
        %1156 = vmatpush1.msra.mxu0 0.0
        %1157 = vmatprep.subr.mxu0 0.0
        %1158 = vmatpush1.msra.mxu0 0.0
        %1159 = vmatprep.subr.mxu0 0.0
        %1160 = vmatpush1.msra.mxu0 0.0
        %1161 = vmatprep.subr.mxu0 0.0
        %1162 = vmatpush1.msra.mxu0 0.0
        %1163 = vmatprep.subr.mxu0 0.0
        %1164 = vmatpush1.msra.mxu0 0.0
        %1165 = vmatprep.subr.mxu0 0.0
        %1166 = vmatpush1.msra.mxu0 0.0
        %1167 = vmatprep.subr.mxu0 0.0
        %1168 = vmatpush1.msra.mxu0 0.0
        %1169 = vmatprep.subr.mxu0 0.0
        %1170 = vmatpush1.msra.mxu0 0.0
        %1171 = vmatprep.subr.mxu0 0.0
        %1172 = vmatpush1.msra.mxu0 0.0
        %1173 = vmatprep.subr.mxu0 0.0
        %1174 = vmatpush1.msra.mxu0 0.0
        %1175 = vmatprep.subr.mxu0 0.0
        %1176 = vmatpush1.msra.mxu0 0.0
        %1177 = vmatprep.mubr.f32.mxu0 0.0
        %1178 = vmatmul.mubr.f32.gmra.mrb[0].mxu0 %v181
        %v1179 = vpop.f32.mrb[0].mxu0
        %v1180 = vadd.f32 0.0, %v1179
        %v1181 = vpop.f32.mrb[0].mxu0
        %1182 = vdwg.mxu0
        %v1184 = vsel %vm183, %v1107, 0
        %1186 = vmatprep.subr.mxu0 0.0
        %1187 = vmatpush1.msra.mxu0 %v1184
        %1188 = vmatprep.subr.mxu0 0.0
        %1189 = vmatpush1.msra.mxu0 0.0
        %1190 = vmatprep.subr.mxu0 0.0
        %1191 = vmatpush1.msra.mxu0 0.0
        %1192 = vmatprep.subr.mxu0 0.0
        %1193 = vmatpush1.msra.mxu0 0.0
        %1194 = vmatprep.subr.mxu0 0.0
        %1195 = vmatpush1.msra.mxu0 0.0
        %1196 = vmatprep.subr.mxu0 0.0
        %1197 = vmatpush1.msra.mxu0 0.0
        %1198 = vmatprep.subr.mxu0 0.0
        %1199 = vmatpush1.msra.mxu0 0.0
        %1200 = vmatprep.subr.mxu0 0.0
        %1201 = vmatpush1.msra.mxu0 0.0
        %1202 = vmatprep.subr.mxu0 0.0
        %1203 = vmatpush1.msra.mxu0 0.0
        %1204 = vmatprep.subr.mxu0 0.0
        %1205 = vmatpush1.msra.mxu0 0.0
        %1206 = vmatprep.subr.mxu0 0.0
        %1207 = vmatpush1.msra.mxu0 0.0
        %1208 = vmatprep.subr.mxu0 0.0
        %1209 = vmatpush1.msra.mxu0 0.0
        %1210 = vmatprep.subr.mxu0 0.0
        %1211 = vmatpush1.msra.mxu0 0.0
        %1212 = vmatprep.subr.mxu0 0.0
        %1213 = vmatpush1.msra.mxu0 0.0
        %1214 = vmatprep.subr.mxu0 0.0
        %1215 = vmatpush1.msra.mxu0 0.0
        %1216 = vmatprep.subr.mxu0 0.0
        %1217 = vmatpush1.msra.mxu0 0.0
        %1218 = vmatprep.subr.mxu0 0.0
        %1219 = vmatpush1.msra.mxu0 0.0
        %1220 = vmatprep.subr.mxu0 0.0
        %1221 = vmatpush1.msra.mxu0 0.0
        %1222 = vmatprep.subr.mxu0 0.0
        %1223 = vmatpush1.msra.mxu0 0.0
        %1224 = vmatprep.subr.mxu0 0.0
        %1225 = vmatpush1.msra.mxu0 0.0
        %1226 = vmatprep.subr.mxu0 0.0
        %1227 = vmatpush1.msra.mxu0 0.0
        %1228 = vmatprep.subr.mxu0 0.0
        %1229 = vmatpush1.msra.mxu0 0.0
        %1230 = vmatprep.subr.mxu0 0.0
        %1231 = vmatpush1.msra.mxu0 0.0
        %1232 = vmatprep.subr.mxu0 0.0
        %1233 = vmatpush1.msra.mxu0 0.0
        %1234 = vmatprep.subr.mxu0 0.0
        %1235 = vmatpush1.msra.mxu0 0.0
        %1236 = vmatprep.subr.mxu0 0.0
        %1237 = vmatpush1.msra.mxu0 0.0
        %1238 = vmatprep.subr.mxu0 0.0
        %1239 = vmatpush1.msra.mxu0 0.0
        %1240 = vmatprep.subr.mxu0 0.0
        %1241 = vmatpush1.msra.mxu0 0.0
        %1242 = vmatprep.subr.mxu0 0.0
        %1243 = vmatpush1.msra.mxu0 0.0
        %1244 = vmatprep.subr.mxu0 0.0
        %1245 = vmatpush1.msra.mxu0 0.0
        %1246 = vmatprep.subr.mxu0 0.0
        %1247 = vmatpush1.msra.mxu0 0.0
        %1248 = vmatprep.subr.mxu0 0.0
        %1249 = vmatpush1.msra.mxu0 0.0
        %1250 = vmatprep.mubr.f32.mxu0 0.0
        %1251 = vmatmul.mubr.f32.gmra.mrb[0].mxu0 %v258
        %v1252 = vpop.f32.mrb[0].mxu0
        %v1253 = vadd.f32 %v1180, %v1252
        %v1254 = vpop.f32.mrb[0].mxu0
        %1255 = vdwg.mxu0
        %s1256 = scalar_lea.vmem %s1, 44
        %v1257 = vld [vmem:[%s1256] sm:$0xf]
        %v1259 = vsel %vm183, %v1257, 0
        %1261 = vmatprep.subr.mxu0 0.0
        %1262 = vmatpush1.msra.mxu0 %v1259
        %1263 = vmatprep.subr.mxu0 0.0
        %1264 = vmatpush1.msra.mxu0 0.0
        %1265 = vmatprep.subr.mxu0 0.0
        %1266 = vmatpush1.msra.mxu0 0.0
        %1267 = vmatprep.subr.mxu0 0.0
        %1268 = vmatpush1.msra.mxu0 0.0
        %1269 = vmatprep.subr.mxu0 0.0
        %1270 = vmatpush1.msra.mxu0 0.0
        %1271 = vmatprep.subr.mxu0 0.0
        %1272 = vmatpush1.msra.mxu0 0.0
        %1273 = vmatprep.subr.mxu0 0.0
        %1274 = vmatpush1.msra.mxu0 0.0
        %1275 = vmatprep.subr.mxu0 0.0
        %1276 = vmatpush1.msra.mxu0 0.0
        %1277 = vmatprep.subr.mxu0 0.0
        %1278 = vmatpush1.msra.mxu0 0.0
        %1279 = vmatprep.subr.mxu0 0.0
        %1280 = vmatpush1.msra.mxu0 0.0
        %1281 = vmatprep.subr.mxu0 0.0
        %1282 = vmatpush1.msra.mxu0 0.0
        %1283 = vmatprep.subr.mxu0 0.0
        %1284 = vmatpush1.msra.mxu0 0.0
        %1285 = vmatprep.subr.mxu0 0.0
        %1286 = vmatpush1.msra.mxu0 0.0
        %1287 = vmatprep.subr.mxu0 0.0
        %1288 = vmatpush1.msra.mxu0 0.0
        %1289 = vmatprep.subr.mxu0 0.0
        %1290 = vmatpush1.msra.mxu0 0.0
        %1291 = vmatprep.subr.mxu0 0.0
        %1292 = vmatpush1.msra.mxu0 0.0
        %1293 = vmatprep.subr.mxu0 0.0
        %1294 = vmatpush1.msra.mxu0 0.0
        %1295 = vmatprep.subr.mxu0 0.0
        %1296 = vmatpush1.msra.mxu0 0.0
        %1297 = vmatprep.subr.mxu0 0.0
        %1298 = vmatpush1.msra.mxu0 0.0
        %1299 = vmatprep.subr.mxu0 0.0
        %1300 = vmatpush1.msra.mxu0 0.0
        %1301 = vmatprep.subr.mxu0 0.0
        %1302 = vmatpush1.msra.mxu0 0.0
        %1303 = vmatprep.subr.mxu0 0.0
        %1304 = vmatpush1.msra.mxu0 0.0
        %1305 = vmatprep.subr.mxu0 0.0
        %1306 = vmatpush1.msra.mxu0 0.0
        %1307 = vmatprep.subr.mxu0 0.0
        %1308 = vmatpush1.msra.mxu0 0.0
        %1309 = vmatprep.subr.mxu0 0.0
        %1310 = vmatpush1.msra.mxu0 0.0
        %1311 = vmatprep.subr.mxu0 0.0
        %1312 = vmatpush1.msra.mxu0 0.0
        %1313 = vmatprep.subr.mxu0 0.0
        %1314 = vmatpush1.msra.mxu0 0.0
        %1315 = vmatprep.subr.mxu0 0.0
        %1316 = vmatpush1.msra.mxu0 0.0
        %1317 = vmatprep.subr.mxu0 0.0
        %1318 = vmatpush1.msra.mxu0 0.0
        %1319 = vmatprep.subr.mxu0 0.0
        %1320 = vmatpush1.msra.mxu0 0.0
        %1321 = vmatprep.subr.mxu0 0.0
        %1322 = vmatpush1.msra.mxu0 0.0
        %1323 = vmatprep.subr.mxu0 0.0
        %1324 = vmatpush1.msra.mxu0 0.0
        %1325 = vmatprep.mubr.f32.mxu0 0.0
        %1326 = vmatmul.mubr.f32.gmra.mrb[0].mxu0 %v336
        %v1327 = vpop.f32.mrb[0].mxu0
        %v1328 = vadd.f32 0.0, %v1327
        %v1329 = vpop.f32.mrb[0].mxu0
        %1330 = vdwg.mxu0
        %v1331 = vadd.f32 %v1253, %v1328
        %s1332 = scalar_lea.vmem %s1, 60
        %v1333 = vld [vmem:[%s1332] sm:$0xf]
        %v1335 = vsel %vm183, %v1333, 0
        %1337 = vmatprep.subr.mxu0 0.0
        %1338 = vmatpush1.msra.mxu0 %v1335
        %1339 = vmatprep.subr.mxu0 0.0
        %1340 = vmatpush1.msra.mxu0 0.0
        %1341 = vmatprep.subr.mxu0 0.0
        %1342 = vmatpush1.msra.mxu0 0.0
        %1343 = vmatprep.subr.mxu0 0.0
        %1344 = vmatpush1.msra.mxu0 0.0
        %1345 = vmatprep.subr.mxu0 0.0
        %1346 = vmatpush1.msra.mxu0 0.0
        %1347 = vmatprep.subr.mxu0 0.0
        %1348 = vmatpush1.msra.mxu0 0.0
        %1349 = vmatprep.subr.mxu0 0.0
        %1350 = vmatpush1.msra.mxu0 0.0
        %1351 = vmatprep.subr.mxu0 0.0
        %1352 = vmatpush1.msra.mxu0 0.0
        %1353 = vmatprep.subr.mxu0 0.0
        %1354 = vmatpush1.msra.mxu0 0.0
        %1355 = vmatprep.subr.mxu0 0.0
        %1356 = vmatpush1.msra.mxu0 0.0
        %1357 = vmatprep.subr.mxu0 0.0
        %1358 = vmatpush1.msra.mxu0 0.0
        %1359 = vmatprep.subr.mxu0 0.0
        %1360 = vmatpush1.msra.mxu0 0.0
        %1361 = vmatprep.subr.mxu0 0.0
        %1362 = vmatpush1.msra.mxu0 0.0
        %1363 = vmatprep.subr.mxu0 0.0
        %1364 = vmatpush1.msra.mxu0 0.0
        %1365 = vmatprep.subr.mxu0 0.0
        %1366 = vmatpush1.msra.mxu0 0.0
        %1367 = vmatprep.subr.mxu0 0.0
        %1368 = vmatpush1.msra.mxu0 0.0
        %1369 = vmatprep.subr.mxu0 0.0
        %1370 = vmatpush1.msra.mxu0 0.0
        %1371 = vmatprep.subr.mxu0 0.0
        %1372 = vmatpush1.msra.mxu0 0.0
        %1373 = vmatprep.subr.mxu0 0.0
        %1374 = vmatpush1.msra.mxu0 0.0
        %1375 = vmatprep.subr.mxu0 0.0
        %1376 = vmatpush1.msra.mxu0 0.0
        %1377 = vmatprep.subr.mxu0 0.0
        %1378 = vmatpush1.msra.mxu0 0.0
        %1379 = vmatprep.subr.mxu0 0.0
        %1380 = vmatpush1.msra.mxu0 0.0
        %1381 = vmatprep.subr.mxu0 0.0
        %1382 = vmatpush1.msra.mxu0 0.0
        %1383 = vmatprep.subr.mxu0 0.0
        %1384 = vmatpush1.msra.mxu0 0.0
        %1385 = vmatprep.subr.mxu0 0.0
        %1386 = vmatpush1.msra.mxu0 0.0
        %1387 = vmatprep.subr.mxu0 0.0
        %1388 = vmatpush1.msra.mxu0 0.0
        %1389 = vmatprep.subr.mxu0 0.0
        %1390 = vmatpush1.msra.mxu0 0.0
        %1391 = vmatprep.subr.mxu0 0.0
        %1392 = vmatpush1.msra.mxu0 0.0
        %1393 = vmatprep.subr.mxu0 0.0
        %1394 = vmatpush1.msra.mxu0 0.0
        %1395 = vmatprep.subr.mxu0 0.0
        %1396 = vmatpush1.msra.mxu0 0.0
        %1397 = vmatprep.subr.mxu0 0.0
        %1398 = vmatpush1.msra.mxu0 0.0
        %1399 = vmatprep.subr.mxu0 0.0
        %1400 = vmatpush1.msra.mxu0 0.0
        %1401 = vmatprep.mubr.f32.mxu0 0.0
        %1402 = vmatmul.mubr.f32.gmra.mrb[0].mxu0 %v415
        %v1403 = vpop.f32.mrb[0].mxu0
        %v1404 = vadd.f32 0.0, %v1403
        %v1405 = vpop.f32.mrb[0].mxu0
        %1406 = vdwg.mxu0
        %v1407 = vadd.f32 %v1331, %v1404
        %v1408 = vmul.f32 %v1407, %v175
        %v1409 = vld [vmem:[%s150 + $0x3] sm:$0xff]
        %v1410 = vadd.f32 %v1409, %v1408
        %1411 = vst [vmem:[%s150 + $0x3] sm:$0xff] %v1410
        %s1412 = sand.u32 %s85, 1
        %s1413 = scalar_lea.sflag [#allocation3], %s1412
        %s1414 = sand.u32 %s85, 1
        %s1415 = smul.addr %s1414, 16
        %s1416 = scalar_lea.vmem [#allocation2], %s1415
        // Predicated region
        $region29: #{tpu_custom_call.1} parent=27 // pred_check
          %p1417 = pneg %p95
        $region30: #{tpu_custom_call.1} parent=27 // pred_check_branch
          %1419 = sbr.rel (%p1417) target = $region32
        $region31: #{tpu_custom_call.1} parent=27 // pred_region
          %s1420 = smul.u32 2, %s21
          %s1422 = ssub.s32 256, 256
          %1423 = vsyncadd %s1413, %s1422
          %s1424 = smul.addr %s20, 6
          %s1425 = sadd.s32 %s1420, %s1424
          %s1426 = smul.addr %s1425, 128
          %s1427 = scalar_lea.hbm %s2, %s1426
          %s1428 = sshll.u32 %s1416, 4
          %s1429 = int_to_ptr.vmem [resolvable:$true] %s1428
          %1434 = dma.vmem_to_hbm [thread:$0]  %s1429, 256, %s1427, %s1413, 128, 128, 8
        $region32: #{tpu_custom_call.1} parent=27 // pred_fallthru
          _
      $region28: #{tpu_custom_call.1} parent=5 // pred_fallthru
        _
      %p1435 = scmp.le.s32.totalorder 2, %s11
      // Predicated region
      $region33: #{tpu_custom_call.1} parent=5 // pred_check
        %p1436 = pneg %p1435
      $region34: #{tpu_custom_call.1} parent=5 // pred_check_branch
        %1438 = sbr.rel (%p1436) target = $region36
      $region35: #{tpu_custom_call.1} parent=5 // pred_region
        %s1439 = ssub.s32 %s11, 2
        // Predicated region
        $region37: #{tpu_custom_call.1} parent=35 // pred_check
          %p1440 = pneg %p101
        $region38: #{tpu_custom_call.1} parent=35 // pred_check_branch
          %1442 = sbr.rel (%p1440) target = $region40
        $region39: #{tpu_custom_call.1} parent=35 // pred_region
          %s1443 = sand.u32 %s86, 1
          %s1444 = scalar_lea.sflag [#allocation3], %s1443
          %s1445 = sand.u32 %s86, 1
          %s1446 = smul.addr %s1445, 16
          %s1447 = scalar_lea.vmem [#allocation2], %s1446
          %1448 = dma.done %s1444, 256
        $region40: #{tpu_custom_call.1} parent=35 // pred_fallthru
          _
      $region36: #{tpu_custom_call.1} parent=5 // pred_fallthru
        _
    $region6: #{tpu_custom_call.1} parent=1 // loop_footer
      %s15 = sadd.s32 1, %s11
    $region7: #{tpu_custom_call.1} parent=1 // loop_footer_branch
      %10 = sbr.rel target = $region3
    $region8: #{tpu_custom_call.1} parent=1 // loop_exit
      _
    %1449 = vsyncpa [#allocation3], 1
    %s1450 = scalar_lea.sflag [#allocation3], 1
    %1451 = vsyncpa %s1450, 1

</llo_original>
